<compile_context>
chip_gen: v7x
topology: tpu7x:2x2x1
jax: 0.10.0
libtpu: 0.0.40
codegen_flags: <defaults>
</compile_context>

<pallas_src>
import functools

import jax
import jax.numpy as jnp
from jax import lax
from jax.experimental import pallas as pl
from jax.experimental.pallas import tpu as pltpu

_LANES = 128


def _closest_point_kernel(a_ref, bt_ref, o_ref, *, dim, m_chunks, sub_tn, n_sub,
                          unroll):
    """Grid = (N_pad // row_block,).

    a_ref : (row_block, D)        tile of output points (row_block = n_sub*sub_tn)
    bt_ref: (D * m_chunks, 128)   all targets, packed per 128-target chunk,
                                  VMEM resident (constant index_map -> one DMA)
    o_ref : (1, row_block)        lane-dense nearest squared distance
    """
    for s in range(n_sub):                      # static loop over 128-row sub-tiles
        r0 = s * sub_tn

        def chunk_d2(c):
            # Squared distances of this sub-tile's points to the 128 targets of
            # chunk c.  a-columns are re-loaded from VMEM each iteration (load
            # slots have slack); running vreg state stays at the 16-vreg min.
            base = c * dim
            a0 = a_ref[r0:r0 + sub_tn, 0:1]                 # (sub_tn, 1)
            b0 = bt_ref[pl.ds(base, 1), :]                  # (1, 128) lane resident
            d = a0 - b0
            d2 = d * d                                      # no zeros init
            for k in range(1, dim):                         # D tiny & static: unroll
                ak = a_ref[r0:r0 + sub_tn, k:k + 1]
                bk = bt_ref[pl.ds(base + k, 1), :]
                dk = ak - bk
                d2 = d2 + dk * dk
            return d2                                       # (sub_tn, 128)

        def body(c, run_min):
            return jnp.minimum(run_min, chunk_d2(c))        # min carried in vregs

        # Seed the running min with chunk 0 (no jnp.full(inf) + extra minimum).
        run_min = lax.fori_loop(1, m_chunks, body, chunk_d2(0), unroll=unroll)

        # One cross-lane reduction per sub-tile: transpose (XLU) + sublane min,
        # leaving the result lane-dense for an unmasked 128-lane store.
        o_ref[:, r0:r0 + sub_tn] = jnp.min(run_min.T, axis=0, keepdims=True)


def nearest_dists_pallas(preds, targs, *, sub_tn=_LANES, max_row_block=4 * _LANES):
    """Per-point squared distance to nearest target. preds: (N, D), targs: (M, D)."""
    n, dim = preds.shape
    m, dim_t = targs.shape
    assert dim == dim_t, (dim, dim_t)

    preds = preds.astype(jnp.float32)
    targs = targs.astype(jnp.float32)

    # Target layout: packed (D * m_chunks, 128); row c*D + k holds coordinate k
    # of the 128 targets in chunk c (12 B/target resident).
    m_chunks = pl.cdiv(m, _LANES)
    m_pad = m_chunks * _LANES
    bt = targs.T                                            # (D, M)
    if m_pad != m:
        # Sentinel squares to ~3e36 per coordinate (below f32 max), so padded
        # targets never win the min.
        bt = jnp.pad(bt, ((0, 0), (0, m_pad - m)), constant_values=1e18)
    bt = bt.reshape(dim, m_chunks, _LANES).transpose(1, 0, 2)
    bt = bt.reshape(dim * m_chunks, _LANES)

    # Preds tiling: up to 4x128 rows per grid step to amortise the ~600-cycle
    # per-step overhead, without over-padding small N.
    row_block = min(max_row_block, pl.cdiv(n, sub_tn) * sub_tn)
    n_blocks = pl.cdiv(n, row_block)
    n_pad = n_blocks * row_block
    n_sub = row_block // sub_tn
    if n_pad != n:
        preds = jnp.pad(preds, ((0, n_pad - n), (0, 0)))    # padded rows sliced off below

    inner_iters = m_chunks - 1
    unroll = True if inner_iters <= 8 else 8                # always give LLO visibility

    kernel = functools.partial(
        _closest_point_kernel, dim=dim, m_chunks=m_chunks,
        sub_tn=sub_tn, n_sub=n_sub, unroll=unroll)

    # VMEM budget: resident targets are double-buffered by the pipeline (but only
    # DMA'd once: constant index_map); cap at physical per-core VMEM (64 MiB on
    # v7x, 128 MiB on v5e/v6e) with a small margin.
    targ_bytes = int(bt.size) * 4
    tile_bytes = 2 * (row_block * dim + row_block) * 4
    want = max(32 << 20, 2 * targ_bytes + tile_bytes + (16 << 20))
    try:
        phys = int(pltpu.get_tpu_info().vmem_capacity_bytes)
    except Exception:
        phys = 64 << 20                                     # conservative (v7x per-core)
    vmem_limit = int(min(want, max(16 << 20, phys - (2 << 20))))

    out = pl.pallas_call(
        kernel,
        out_shape=jax.ShapeDtypeStruct((1, n_pad), jnp.float32),
        grid_spec=pltpu.PrefetchScalarGridSpec(
            num_scalar_prefetch=0,
            grid=(n_blocks,),
            in_specs=[
                pl.BlockSpec((row_block, dim), lambda i: (i, 0)),          # preds tile
                pl.BlockSpec((dim * m_chunks, _LANES), lambda i: (0, 0)),  # resident targets
            ],
            out_specs=pl.BlockSpec((1, row_block), lambda i: (0, i)),      # lane-dense output
        ),
        compiler_params=pltpu.CompilerParams(
            dimension_semantics=("parallel",),   # shards the N axis across v7x's 2 TCs
            vmem_limit_bytes=vmem_limit,
        ),
    )(preds, bt)
    return out[0, :n]                            # (N,)


def closest_point_loss(outputs, targets, reduce_method="mean", batch_size=10000):
    # batch_size kept for API parity with the torch module; the kernel's grid over
    # output-point tiles subsumes the chunking (results are identical).
    del batch_size
    dists = nearest_dists_pallas(outputs, targets)
    if reduce_method == "mean":
        return jnp.mean(dists)
    if reduce_method == "sum":
        return jnp.sum(dists)
    raise ValueError(f"Unknown reduce method: {reduce_method}")


def _reference_loss(outputs, targets, reduce_method="mean"):
    diff = outputs[:, None, :] - targets[None, :, :]
    dist = jnp.einsum("ijk,ijk->ij", diff, diff)
    nearest = jnp.min(dist, axis=-1)
    return jnp.mean(nearest) if reduce_method == "mean" else jnp.sum(nearest)


if __name__ == "__main__":
    key = jax.random.PRNGKey(0)
    k1, k2 = jax.random.split(key)
    N, M, D = 200, 333, 3          # non-multiples of 128: exercises the padding path
    outputs = jax.random.normal(k1, (N, D), dtype=jnp.float32)
    targets = jax.random.normal(k2, (M, D), dtype=jnp.float32)

    loss = closest_point_loss(outputs, targets, reduce_method="mean")
    loss = jax.block_until_ready(loss)
    ref = _reference_loss(outputs, targets, "mean")
    assert jnp.allclose(loss, ref, rtol=1e-5, atol=1e-5), (loss, ref)

    loss_sum = closest_point_loss(outputs, targets, reduce_method="sum")
    loss_sum = jax.block_until_ready(loss_sum)
    ref_sum = _reference_loss(outputs, targets, "sum")
    assert jnp.allclose(loss_sum, ref_sum, rtol=1e-5, atol=1e-4), (loss_sum, ref_sum)

    print("KERNEL_OK")
</pallas_src>

<mosaic_0001>
module attributes {stable_mosaic.version = 11 : i64} {
  func.func @_closest_point_kernel(%arg0: i32, %arg1: memref<256x3xf32, #tpu.memory_space<vmem>>, %arg2: memref<9x128xf32, #tpu.memory_space<vmem>>, %arg3: memref<1x256xf32, #tpu.memory_space<vmem>>) attributes {dimension_semantics = [#tpu.dimension_semantics<parallel>], iteration_bounds = array<i64: 1>, scalar_prefetch = 0 : i64, scratch_operands = 0 : i64, tpu.core_type = #tpu.core_type<tc>, window_params = [{transform_indices = @transform_0, window_bounds = array<i64: 256, 3>}, {pipeline_mode = #tpu.pipeline_mode<synchronous>, transform_indices = @transform_1, window_bounds = array<i64: 9, 128>}, {transform_indices = @transform_2, window_bounds = array<i64: 1, 256>}]} {
    %c0 = arith.constant 0 : index
    %c0_0 = arith.constant 0 : index
    %0 = vector.load %arg1[%c0, %c0_0] : memref<256x3xf32, #tpu.memory_space<vmem>>, vector<128x1xf32>
    %c0_1 = arith.constant 0 : index
    %c0_2 = arith.constant 0 : index
    %1 = vector.load %arg2[%c0_1, %c0_2] : memref<9x128xf32, #tpu.memory_space<vmem>>, vector<1x128xf32>
    %2 = vector.broadcast %0 : vector<128x1xf32> to vector<128x128xf32>
    %3 = vector.broadcast %1 : vector<1x128xf32> to vector<128x128xf32>
    %4 = arith.subf %2, %3 : vector<128x128xf32>
    %5 = arith.mulf %4, %4 : vector<128x128xf32>
    %c0_3 = arith.constant 0 : index
    %c1 = arith.constant 1 : index
    %6 = vector.load %arg1[%c0_3, %c1] : memref<256x3xf32, #tpu.memory_space<vmem>>, vector<128x1xf32>
    %c1_4 = arith.constant 1 : index
    %c0_5 = arith.constant 0 : index
    %7 = vector.load %arg2[%c1_4, %c0_5] : memref<9x128xf32, #tpu.memory_space<vmem>>, vector<1x128xf32>
    %8 = vector.broadcast %6 : vector<128x1xf32> to vector<128x128xf32>
    %9 = vector.broadcast %7 : vector<1x128xf32> to vector<128x128xf32>
    %10 = arith.subf %8, %9 : vector<128x128xf32>
    %11 = arith.mulf %10, %10 : vector<128x128xf32>
    %12 = arith.addf %5, %11 : vector<128x128xf32>
    %c0_6 = arith.constant 0 : index
    %c2 = arith.constant 2 : index
    %13 = vector.load %arg1[%c0_6, %c2] : memref<256x3xf32, #tpu.memory_space<vmem>>, vector<128x1xf32>
    %c2_7 = arith.constant 2 : index
    %c0_8 = arith.constant 0 : index
    %14 = vector.load %arg2[%c2_7, %c0_8] : memref<9x128xf32, #tpu.memory_space<vmem>>, vector<1x128xf32>
    %15 = vector.broadcast %13 : vector<128x1xf32> to vector<128x128xf32>
    %16 = vector.broadcast %14 : vector<1x128xf32> to vector<128x128xf32>
    %17 = arith.subf %15, %16 : vector<128x128xf32>
    %18 = arith.mulf %17, %17 : vector<128x128xf32>
    %19 = arith.addf %12, %18 : vector<128x128xf32>
    %c1_i32 = arith.constant 1 : i32
    %c3_i32 = arith.constant 3 : i32
    %20 = arith.muli %c1_i32, %c3_i32 : i32
    %c0_9 = arith.constant 0 : index
    %c0_10 = arith.constant 0 : index
    %21 = vector.load %arg1[%c0_9, %c0_10] : memref<256x3xf32, #tpu.memory_space<vmem>>, vector<128x1xf32>
    %22 = arith.index_cast %20 : i32 to index
    %c0_11 = arith.constant 0 : index
    %23 = vector.load %arg2[%22, %c0_11] : memref<9x128xf32, #tpu.memory_space<vmem>>, vector<1x128xf32>
    %24 = vector.broadcast %21 : vector<128x1xf32> to vector<128x128xf32>
    %25 = vector.broadcast %23 : vector<1x128xf32> to vector<128x128xf32>
    %26 = arith.subf %24, %25 : vector<128x128xf32>
    %27 = arith.mulf %26, %26 : vector<128x128xf32>
    %c0_12 = arith.constant 0 : index
    %c1_13 = arith.constant 1 : index
    %28 = vector.load %arg1[%c0_12, %c1_13] : memref<256x3xf32, #tpu.memory_space<vmem>>, vector<128x1xf32>
    %c1_i32_14 = arith.constant 1 : i32
    %29 = arith.addi %20, %c1_i32_14 : i32
    %30 = arith.index_cast %29 : i32 to index
    %c0_15 = arith.constant 0 : index
    %31 = vector.load %arg2[%30, %c0_15] : memref<9x128xf32, #tpu.memory_space<vmem>>, vector<1x128xf32>
    %32 = vector.broadcast %28 : vector<128x1xf32> to vector<128x128xf32>
    %33 = vector.broadcast %31 : vector<1x128xf32> to vector<128x128xf32>
    %34 = arith.subf %32, %33 : vector<128x128xf32>
    %35 = arith.mulf %34, %34 : vector<128x128xf32>
    %36 = arith.addf %27, %35 : vector<128x128xf32>
    %c0_16 = arith.constant 0 : index
    %c2_17 = arith.constant 2 : index
    %37 = vector.load %arg1[%c0_16, %c2_17] : memref<256x3xf32, #tpu.memory_space<vmem>>, vector<128x1xf32>
    %c2_i32 = arith.constant 2 : i32
    %38 = arith.addi %20, %c2_i32 : i32
    %39 = arith.index_cast %38 : i32 to index
    %c0_18 = arith.constant 0 : index
    %40 = vector.load %arg2[%39, %c0_18] : memref<9x128xf32, #tpu.memory_space<vmem>>, vector<1x128xf32>
    %41 = vector.broadcast %37 : vector<128x1xf32> to vector<128x128xf32>
    %42 = vector.broadcast %40 : vector<1x128xf32> to vector<128x128xf32>
    %43 = arith.subf %41, %42 : vector<128x128xf32>
    %44 = arith.mulf %43, %43 : vector<128x128xf32>
    %45 = arith.addf %36, %44 : vector<128x128xf32>
    %46 = arith.minimumf %19, %45 : vector<128x128xf32>
    %c2_i32_19 = arith.constant 2 : i32
    %c3_i32_20 = arith.constant 3 : i32
    %47 = arith.muli %c2_i32_19, %c3_i32_20 : i32
    %c0_21 = arith.constant 0 : index
    %c0_22 = arith.constant 0 : index
    %48 = vector.load %arg1[%c0_21, %c0_22] : memref<256x3xf32, #tpu.memory_space<vmem>>, vector<128x1xf32>
    %49 = arith.index_cast %47 : i32 to index
    %c0_23 = arith.constant 0 : index
    %50 = vector.load %arg2[%49, %c0_23] : memref<9x128xf32, #tpu.memory_space<vmem>>, vector<1x128xf32>
    %51 = vector.broadcast %48 : vector<128x1xf32> to vector<128x128xf32>
    %52 = vector.broadcast %50 : vector<1x128xf32> to vector<128x128xf32>
    %53 = arith.subf %51, %52 : vector<128x128xf32>
    %54 = arith.mulf %53, %53 : vector<128x128xf32>
    %c0_24 = arith.constant 0 : index
    %c1_25 = arith.constant 1 : index
    %55 = vector.load %arg1[%c0_24, %c1_25] : memref<256x3xf32, #tpu.memory_space<vmem>>, vector<128x1xf32>
    %c1_i32_26 = arith.constant 1 : i32
    %56 = arith.addi %47, %c1_i32_26 : i32
    %57 = arith.index_cast %56 : i32 to index
    %c0_27 = arith.constant 0 : index
    %58 = vector.load %arg2[%57, %c0_27] : memref<9x128xf32, #tpu.memory_space<vmem>>, vector<1x128xf32>
    %59 = vector.broadcast %55 : vector<128x1xf32> to vector<128x128xf32>
    %60 = vector.broadcast %58 : vector<1x128xf32> to vector<128x128xf32>
    %61 = arith.subf %59, %60 : vector<128x128xf32>
    %62 = arith.mulf %61, %61 : vector<128x128xf32>
    %63 = arith.addf %54, %62 : vector<128x128xf32>
    %c0_28 = arith.constant 0 : index
    %c2_29 = arith.constant 2 : index
    %64 = vector.load %arg1[%c0_28, %c2_29] : memref<256x3xf32, #tpu.memory_space<vmem>>, vector<128x1xf32>
    %c2_i32_30 = arith.constant 2 : i32
    %65 = arith.addi %47, %c2_i32_30 : i32
    %66 = arith.index_cast %65 : i32 to index
    %c0_31 = arith.constant 0 : index
    %67 = vector.load %arg2[%66, %c0_31] : memref<9x128xf32, #tpu.memory_space<vmem>>, vector<1x128xf32>
    %68 = vector.broadcast %64 : vector<128x1xf32> to vector<128x128xf32>
    %69 = vector.broadcast %67 : vector<1x128xf32> to vector<128x128xf32>
    %70 = arith.subf %68, %69 : vector<128x128xf32>
    %71 = arith.mulf %70, %70 : vector<128x128xf32>
    %72 = arith.addf %63, %71 : vector<128x128xf32>
    %73 = arith.minimumf %46, %72 : vector<128x128xf32>
    %c2_i32_32 = arith.constant 2 : i32
    %74 = tpu.transpose %73, [1, 0] : vector<128x128xf32> -> vector<128x128xf32>
    %cst = arith.constant dense<0x7F800000> : vector<128xf32>
    %75 = vector.multi_reduction <minimumf>, %74, %cst [0] : vector<128x128xf32> to vector<128xf32>
    %76 = vector.shape_cast %75 : vector<128xf32> to vector<1x128xf32>
    %c0_33 = arith.constant 0 : index
    %c0_34 = arith.constant 0 : index
    %77 = vector.load %arg3[%c0_33, %c0_34] : memref<1x256xf32, #tpu.memory_space<vmem>>, vector<1x128xf32>
    tpu.vector_store %arg3[%c0_33, %c0_34], %76 {strides = array<i32>} : memref<1x256xf32, #tpu.memory_space<vmem>>, vector<1x128xf32>,
    %c128 = arith.constant 128 : index
    %c0_35 = arith.constant 0 : index
    %78 = vector.load %arg1[%c128, %c0_35] : memref<256x3xf32, #tpu.memory_space<vmem>>, vector<128x1xf32>
    %c0_36 = arith.constant 0 : index
    %c0_37 = arith.constant 0 : index
    %79 = vector.load %arg2[%c0_36, %c0_37] : memref<9x128xf32, #tpu.memory_space<vmem>>, vector<1x128xf32>
    %80 = vector.broadcast %78 : vector<128x1xf32> to vector<128x128xf32>
    %81 = vector.broadcast %79 : vector<1x128xf32> to vector<128x128xf32>
    %82 = arith.subf %80, %81 : vector<128x128xf32>
    %83 = arith.mulf %82, %82 : vector<128x128xf32>
    %c128_38 = arith.constant 128 : index
    %c1_39 = arith.constant 1 : index
    %84 = vector.load %arg1[%c128_38, %c1_39] : memref<256x3xf32, #tpu.memory_space<vmem>>, vector<128x1xf32>
    %c1_40 = arith.constant 1 : index
    %c0_41 = arith.constant 0 : index
    %85 = vector.load %arg2[%c1_40, %c0_41] : memref<9x128xf32, #tpu.memory_space<vmem>>, vector<1x128xf32>
    %86 = vector.broadcast %84 : vector<128x1xf32> to vector<128x128xf32>
    %87 = vector.broadcast %85 : vector<1x128xf32> to vector<128x128xf32>
    %88 = arith.subf %86, %87 : vector<128x128xf32>
    %89 = arith.mulf %88, %88 : vector<128x128xf32>
    %90 = arith.addf %83, %89 : vector<128x128xf32>
    %c128_42 = arith.constant 128 : index
    %c2_43 = arith.constant 2 : index
    %91 = vector.load %arg1[%c128_42, %c2_43] : memref<256x3xf32, #tpu.memory_space<vmem>>, vector<128x1xf32>
    %c2_44 = arith.constant 2 : index
    %c0_45 = arith.constant 0 : index
    %92 = vector.load %arg2[%c2_44, %c0_45] : memref<9x128xf32, #tpu.memory_space<vmem>>, vector<1x128xf32>
    %93 = vector.broadcast %91 : vector<128x1xf32> to vector<128x128xf32>
    %94 = vector.broadcast %92 : vector<1x128xf32> to vector<128x128xf32>
    %95 = arith.subf %93, %94 : vector<128x128xf32>
    %96 = arith.mulf %95, %95 : vector<128x128xf32>
    %97 = arith.addf %90, %96 : vector<128x128xf32>
    %c1_i32_46 = arith.constant 1 : i32
    %c3_i32_47 = arith.constant 3 : i32
    %98 = arith.muli %c1_i32_46, %c3_i32_47 : i32
    %c128_48 = arith.constant 128 : index
    %c0_49 = arith.constant 0 : index
    %99 = vector.load %arg1[%c128_48, %c0_49] : memref<256x3xf32, #tpu.memory_space<vmem>>, vector<128x1xf32>
    %100 = arith.index_cast %98 : i32 to index
    %c0_50 = arith.constant 0 : index
    %101 = vector.load %arg2[%100, %c0_50] : memref<9x128xf32, #tpu.memory_space<vmem>>, vector<1x128xf32>
    %102 = vector.broadcast %99 : vector<128x1xf32> to vector<128x128xf32>
    %103 = vector.broadcast %101 : vector<1x128xf32> to vector<128x128xf32>
    %104 = arith.subf %102, %103 : vector<128x128xf32>
    %105 = arith.mulf %104, %104 : vector<128x128xf32>
    %c128_51 = arith.constant 128 : index
    %c1_52 = arith.constant 1 : index
    %106 = vector.load %arg1[%c128_51, %c1_52] : memref<256x3xf32, #tpu.memory_space<vmem>>, vector<128x1xf32>
    %c1_i32_53 = arith.constant 1 : i32
    %107 = arith.addi %98, %c1_i32_53 : i32
    %108 = arith.index_cast %107 : i32 to index
    %c0_54 = arith.constant 0 : index
    %109 = vector.load %arg2[%108, %c0_54] : memref<9x128xf32, #tpu.memory_space<vmem>>, vector<1x128xf32>
    %110 = vector.broadcast %106 : vector<128x1xf32> to vector<128x128xf32>
    %111 = vector.broadcast %109 : vector<1x128xf32> to vector<128x128xf32>
    %112 = arith.subf %110, %111 : vector<128x128xf32>
    %113 = arith.mulf %112, %112 : vector<128x128xf32>
    %114 = arith.addf %105, %113 : vector<128x128xf32>
    %c128_55 = arith.constant 128 : index
    %c2_56 = arith.constant 2 : index
    %115 = vector.load %arg1[%c128_55, %c2_56] : memref<256x3xf32, #tpu.memory_space<vmem>>, vector<128x1xf32>
    %c2_i32_57 = arith.constant 2 : i32
    %116 = arith.addi %98, %c2_i32_57 : i32
    %117 = arith.index_cast %116 : i32 to index
    %c0_58 = arith.constant 0 : index
    %118 = vector.load %arg2[%117, %c0_58] : memref<9x128xf32, #tpu.memory_space<vmem>>, vector<1x128xf32>
    %119 = vector.broadcast %115 : vector<128x1xf32> to vector<128x128xf32>
    %120 = vector.broadcast %118 : vector<1x128xf32> to vector<128x128xf32>
    %121 = arith.subf %119, %120 : vector<128x128xf32>
    %122 = arith.mulf %121, %121 : vector<128x128xf32>
    %123 = arith.addf %114, %122 : vector<128x128xf32>
    %124 = arith.minimumf %97, %123 : vector<128x128xf32>
    %c2_i32_59 = arith.constant 2 : i32
    %c3_i32_60 = arith.constant 3 : i32
    %125 = arith.muli %c2_i32_59, %c3_i32_60 : i32
    %c128_61 = arith.constant 128 : index
    %c0_62 = arith.constant 0 : index
    %126 = vector.load %arg1[%c128_61, %c0_62] : memref<256x3xf32, #tpu.memory_space<vmem>>, vector<128x1xf32>
    %127 = arith.index_cast %125 : i32 to index
    %c0_63 = arith.constant 0 : index
    %128 = vector.load %arg2[%127, %c0_63] : memref<9x128xf32, #tpu.memory_space<vmem>>, vector<1x128xf32>
    %129 = vector.broadcast %126 : vector<128x1xf32> to vector<128x128xf32>
    %130 = vector.broadcast %128 : vector<1x128xf32> to vector<128x128xf32>
    %131 = arith.subf %129, %130 : vector<128x128xf32>
    %132 = arith.mulf %131, %131 : vector<128x128xf32>
    %c128_64 = arith.constant 128 : index
    %c1_65 = arith.constant 1 : index
    %133 = vector.load %arg1[%c128_64, %c1_65] : memref<256x3xf32, #tpu.memory_space<vmem>>, vector<128x1xf32>
    %c1_i32_66 = arith.constant 1 : i32
    %134 = arith.addi %125, %c1_i32_66 : i32
    %135 = arith.index_cast %134 : i32 to index
    %c0_67 = arith.constant 0 : index
    %136 = vector.load %arg2[%135, %c0_67] : memref<9x128xf32, #tpu.memory_space<vmem>>, vector<1x128xf32>
    %137 = vector.broadcast %133 : vector<128x1xf32> to vector<128x128xf32>
    %138 = vector.broadcast %136 : vector<1x128xf32> to vector<128x128xf32>
    %139 = arith.subf %137, %138 : vector<128x128xf32>
    %140 = arith.mulf %139, %139 : vector<128x128xf32>
    %141 = arith.addf %132, %140 : vector<128x128xf32>
    %c128_68 = arith.constant 128 : index
    %c2_69 = arith.constant 2 : index
    %142 = vector.load %arg1[%c128_68, %c2_69] : memref<256x3xf32, #tpu.memory_space<vmem>>, vector<128x1xf32>
    %c2_i32_70 = arith.constant 2 : i32
    %143 = arith.addi %125, %c2_i32_70 : i32
    %144 = arith.index_cast %143 : i32 to index
    %c0_71 = arith.constant 0 : index
    %145 = vector.load %arg2[%144, %c0_71] : memref<9x128xf32, #tpu.memory_space<vmem>>, vector<1x128xf32>
    %146 = vector.broadcast %142 : vector<128x1xf32> to vector<128x128xf32>
    %147 = vector.broadcast %145 : vector<1x128xf32> to vector<128x128xf32>
    %148 = arith.subf %146, %147 : vector<128x128xf32>
    %149 = arith.mulf %148, %148 : vector<128x128xf32>
    %150 = arith.addf %141, %149 : vector<128x128xf32>
    %151 = arith.minimumf %124, %150 : vector<128x128xf32>
    %c2_i32_72 = arith.constant 2 : i32
    %152 = tpu.transpose %151, [1, 0] : vector<128x128xf32> -> vector<128x128xf32>
    %cst_73 = arith.constant dense<0x7F800000> : vector<128xf32>
    %153 = vector.multi_reduction <minimumf>, %152, %cst_73 [0] : vector<128x128xf32> to vector<128xf32>
    %154 = vector.shape_cast %153 : vector<128xf32> to vector<1x128xf32>
    %c0_74 = arith.constant 0 : index
    %c128_75 = arith.constant 128 : index
    %155 = vector.load %arg3[%c0_74, %c128_75] : memref<1x256xf32, #tpu.memory_space<vmem>>, vector<1x128xf32>
    tpu.vector_store %arg3[%c0_74, %c128_75], %154 {strides = array<i32>} : memref<1x256xf32, #tpu.memory_space<vmem>>, vector<1x128xf32>,
    return
  }
  func.func @transform_0(%arg0: i32) -> (i32, i32) {
    %c0_i32 = arith.constant 0 : i32
    %c0_i32_0 = arith.constant 0 : i32
    return %arg0, %c0_i32 : i32, i32
  }
  func.func @transform_1(%arg0: i32) -> (i32, i32) {
    %c0_i32 = arith.constant 0 : i32
    %c0_i32_0 = arith.constant 0 : i32
    %c0_i32_1 = arith.constant 0 : i32
    return %c0_i32, %c0_i32_0 : i32, i32
  }
  func.func @transform_2(%arg0: i32) -> (i32, i32) {
    %c0_i32 = arith.constant 0 : i32
    %c0_i32_0 = arith.constant 0 : i32
    return %c0_i32, %arg0 : i32, i32
  }
}

</mosaic_0001>

<llo_original>
// kernel: tpu_custom_call.1
$region0: #{tpu_custom_call.1}
  #allocation0 [shape = 'u32[]', space=smem, size = 0x4, offset = 0x4, fixed_abs, tag = 'smem constant byte address 0x4 - core index']
  #allocation1 [shape = 'u32[144,128]{1,0:T(1,128)}', space=vmem, size = 0x12000, scoped, tag = 'internal scratch']
  %s0 = inlined_call_operand.vmem [shape: f32[256,3], index: 0, kind: input, shape index: {}]
  %s1 = inlined_call_operand.vmem [shape: f32[9,128], index: 1, kind: input, shape index: {}]
  %s2 = inlined_call_operand.hbm [shape: f32[1,256], index: 2, kind: output, shape index: {}]
  %s3 = sld [smem:[#allocation0]]
  $region18: #{tpu_custom_call.1} parent=0
    _
  %s5 = ssub.s32 1, %s3
  %s6 = scalar_select 0, %s5, %s3
  $region1: #{tpu_custom_call.1} parent=0
    #allocation2 [shape = 'u8[1024]{0}', space=vmem, size = 0x400, scoped, tag = 'output window, operand 0, single buffered']
    #allocation3 [shape = 's32[1]{0}', space=sflag, size = 0x4, scoped, tag = 'scoped memory for tpu_custom_call.1']
    %7 = vsyncpa [#allocation3], 0
    // Predicated region
    $region2: #{tpu_custom_call.1} parent=1 // pred_check
      _
    $region3: #{tpu_custom_call.1} parent=1 // pred_check_branch
      %9 = sbr.rel (0) target = $region5
    $region4: #{tpu_custom_call.1} parent=1 // pred_region
      _
    $region5: #{tpu_custom_call.1} parent=1 // pred_fallthru
      _
    // Predicated region
    $region6: #{tpu_custom_call.1} parent=1 // pred_check
      _
    $region7: #{tpu_custom_call.1} parent=1 // pred_check_branch
      %11 = sbr.rel (0) target = $region9
    $region8: #{tpu_custom_call.1} parent=1 // pred_region
      _
    $region9: #{tpu_custom_call.1} parent=1 // pred_fallthru
      _
    %v12 = vld [vmem:[%s0] sm:$0xff]
    %v13 = vld [vmem:[%s0 + $0x8] sm:$0xff]
    %v14 = vld [vmem:[%s0 + $0x10] sm:$0xff]
    %v15 = vld [vmem:[%s0 + $0x18] sm:$0xff]
    %v16 = vld [vmem:[%s0 + $0x20] sm:$0xff]
    %v17 = vld [vmem:[%s0 + $0x28] sm:$0xff]
    %v18 = vld [vmem:[%s0 + $0x30] sm:$0xff]
    %v19 = vld [vmem:[%s0 + $0x38] sm:$0xff]
    %v20 = vld [vmem:[%s0 + $0x40] sm:$0xff]
    %v21 = vld [vmem:[%s0 + $0x48] sm:$0xff]
    %v22 = vld [vmem:[%s0 + $0x50] sm:$0xff]
    %v23 = vld [vmem:[%s0 + $0x58] sm:$0xff]
    %v24 = vld [vmem:[%s0 + $0x60] sm:$0xff]
    %v25 = vld [vmem:[%s0 + $0x68] sm:$0xff]
    %v26 = vld [vmem:[%s0 + $0x70] sm:$0xff]
    %v27 = vld [vmem:[%s0 + $0x78] sm:$0xff]
    %v28 = vld [vmem:[%s1] sm:$0x1]
    %30 = vset.pattern.permute.xlu0 0
    %31 = vperm.xlu0 %30, %v12
    %v32 = vpop.permute.xlu0 %31
    %35 = vset.pattern.permute.xlu0 0
    %36 = vperm.xlu0 %35, %v13
    %v37 = vpop.permute.xlu0 %36
    %40 = vset.pattern.permute.xlu0 0
    %41 = vperm.xlu0 %40, %v14
    %v42 = vpop.permute.xlu0 %41
    %45 = vset.pattern.permute.xlu0 0
    %46 = vperm.xlu0 %45, %v15
    %v47 = vpop.permute.xlu0 %46
    %50 = vset.pattern.permute.xlu0 0
    %51 = vperm.xlu0 %50, %v16
    %v52 = vpop.permute.xlu0 %51
    %55 = vset.pattern.permute.xlu0 0
    %56 = vperm.xlu0 %55, %v17
    %v57 = vpop.permute.xlu0 %56
    %60 = vset.pattern.permute.xlu0 0
    %61 = vperm.xlu0 %60, %v18
    %v62 = vpop.permute.xlu0 %61
    %65 = vset.pattern.permute.xlu0 0
    %66 = vperm.xlu0 %65, %v19
    %v67 = vpop.permute.xlu0 %66
    %70 = vset.pattern.permute.xlu0 0
    %71 = vperm.xlu0 %70, %v20
    %v72 = vpop.permute.xlu0 %71
    %75 = vset.pattern.permute.xlu0 0
    %76 = vperm.xlu0 %75, %v21
    %v77 = vpop.permute.xlu0 %76
    %80 = vset.pattern.permute.xlu0 0
    %81 = vperm.xlu0 %80, %v22
    %v82 = vpop.permute.xlu0 %81
    %85 = vset.pattern.permute.xlu0 0
    %86 = vperm.xlu0 %85, %v23
    %v87 = vpop.permute.xlu0 %86
    %90 = vset.pattern.permute.xlu0 0
    %91 = vperm.xlu0 %90, %v24
    %v92 = vpop.permute.xlu0 %91
    %95 = vset.pattern.permute.xlu0 0
    %96 = vperm.xlu0 %95, %v25
    %v97 = vpop.permute.xlu0 %96
    %100 = vset.pattern.permute.xlu0 0
    %101 = vperm.xlu0 %100, %v26
    %v102 = vpop.permute.xlu0 %101
    %105 = vset.pattern.permute.xlu0 0
    %106 = vperm.xlu0 %105, %v27
    %v107 = vpop.permute.xlu0 %106
    %v109 = vlaneseq
    %v110 = vshrl.u32 %v109, 7
    %v111 = vsub.s32 0, %v110
    %v112 = vrot.slane %v28, %v111
    %v113 = vsub.f32 %v32, %v112
    %v114 = vsub.f32 %v37, %v112
    %v115 = vsub.f32 %v42, %v112
    %v116 = vsub.f32 %v47, %v112
    %v117 = vsub.f32 %v52, %v112
    %v118 = vsub.f32 %v57, %v112
    %v119 = vsub.f32 %v62, %v112
    %v120 = vsub.f32 %v67, %v112
    %v121 = vsub.f32 %v72, %v112
    %v122 = vsub.f32 %v77, %v112
    %v123 = vsub.f32 %v82, %v112
    %v124 = vsub.f32 %v87, %v112
    %v125 = vsub.f32 %v92, %v112
    %v126 = vsub.f32 %v97, %v112
    %v127 = vsub.f32 %v102, %v112
    %v128 = vsub.f32 %v107, %v112
    %v129 = vmul.f32 %v113, %v113
    %v130 = vmul.f32 %v114, %v114
    %v131 = vmul.f32 %v115, %v115
    %v132 = vmul.f32 %v116, %v116
    %v133 = vmul.f32 %v117, %v117
    %v134 = vmul.f32 %v118, %v118
    %v135 = vmul.f32 %v119, %v119
    %v136 = vmul.f32 %v120, %v120
    %v137 = vmul.f32 %v121, %v121
    %v138 = vmul.f32 %v122, %v122
    %v139 = vmul.f32 %v123, %v123
    %v140 = vmul.f32 %v124, %v124
    %v141 = vmul.f32 %v125, %v125
    %v142 = vmul.f32 %v126, %v126
    %v143 = vmul.f32 %v127, %v127
    %v144 = vmul.f32 %v128, %v128
    %v145 = vld [vmem:[%s1 + $0x1] sm:$0x1]
    %146 = vset.pattern.permute.xlu0 1
    %147 = vperm.xlu0 %146, %v12
    %v148 = vpop.permute.xlu0 %147
    %150 = vset.pattern.permute.xlu0 1
    %151 = vperm.xlu0 %150, %v13
    %v152 = vpop.permute.xlu0 %151
    %154 = vset.pattern.permute.xlu0 1
    %155 = vperm.xlu0 %154, %v14
    %v156 = vpop.permute.xlu0 %155
    %158 = vset.pattern.permute.xlu0 1
    %159 = vperm.xlu0 %158, %v15
    %v160 = vpop.permute.xlu0 %159
    %162 = vset.pattern.permute.xlu0 1
    %163 = vperm.xlu0 %162, %v16
    %v164 = vpop.permute.xlu0 %163
    %166 = vset.pattern.permute.xlu0 1
    %167 = vperm.xlu0 %166, %v17
    %v168 = vpop.permute.xlu0 %167
    %170 = vset.pattern.permute.xlu0 1
    %171 = vperm.xlu0 %170, %v18
    %v172 = vpop.permute.xlu0 %171
    %174 = vset.pattern.permute.xlu0 1
    %175 = vperm.xlu0 %174, %v19
    %v176 = vpop.permute.xlu0 %175
    %178 = vset.pattern.permute.xlu0 1
    %179 = vperm.xlu0 %178, %v20
    %v180 = vpop.permute.xlu0 %179
    %182 = vset.pattern.permute.xlu0 1
    %183 = vperm.xlu0 %182, %v21
    %v184 = vpop.permute.xlu0 %183
    %186 = vset.pattern.permute.xlu0 1
    %187 = vperm.xlu0 %186, %v22
    %v188 = vpop.permute.xlu0 %187
    %190 = vset.pattern.permute.xlu0 1
    %191 = vperm.xlu0 %190, %v23
    %v192 = vpop.permute.xlu0 %191
    %194 = vset.pattern.permute.xlu0 1
    %195 = vperm.xlu0 %194, %v24
    %v196 = vpop.permute.xlu0 %195
    %198 = vset.pattern.permute.xlu0 1
    %199 = vperm.xlu0 %198, %v25
    %v200 = vpop.permute.xlu0 %199
    %202 = vset.pattern.permute.xlu0 1
    %203 = vperm.xlu0 %202, %v26
    %v204 = vpop.permute.xlu0 %203
    %206 = vset.pattern.permute.xlu0 1
    %207 = vperm.xlu0 %206, %v27
    %v208 = vpop.permute.xlu0 %207
    %v210 = vlaneseq
    %v211 = vshrl.u32 %v210, 7
    %v212 = vsub.s32 0, %v211
    %v213 = vrot.slane %v145, %v212
    %v214 = vsub.f32 %v148, %v213
    %v215 = vsub.f32 %v152, %v213
    %v216 = vsub.f32 %v156, %v213
    %v217 = vsub.f32 %v160, %v213
    %v218 = vsub.f32 %v164, %v213
    %v219 = vsub.f32 %v168, %v213
    %v220 = vsub.f32 %v172, %v213
    %v221 = vsub.f32 %v176, %v213
    %v222 = vsub.f32 %v180, %v213
    %v223 = vsub.f32 %v184, %v213
    %v224 = vsub.f32 %v188, %v213
    %v225 = vsub.f32 %v192, %v213
    %v226 = vsub.f32 %v196, %v213
    %v227 = vsub.f32 %v200, %v213
    %v228 = vsub.f32 %v204, %v213
    %v229 = vsub.f32 %v208, %v213
    %v230 = vmul.f32 %v214, %v214
    %v231 = vmul.f32 %v215, %v215
    %v232 = vmul.f32 %v216, %v216
    %v233 = vmul.f32 %v217, %v217
    %v234 = vmul.f32 %v218, %v218
    %v235 = vmul.f32 %v219, %v219
    %v236 = vmul.f32 %v220, %v220
    %v237 = vmul.f32 %v221, %v221
    %v238 = vmul.f32 %v222, %v222
    %v239 = vmul.f32 %v223, %v223
    %v240 = vmul.f32 %v224, %v224
    %v241 = vmul.f32 %v225, %v225
    %v242 = vmul.f32 %v226, %v226
    %v243 = vmul.f32 %v227, %v227
    %v244 = vmul.f32 %v228, %v228
    %v245 = vmul.f32 %v229, %v229
    %v246 = vadd.f32 %v129, %v230
    %v247 = vadd.f32 %v130, %v231
    %v248 = vadd.f32 %v131, %v232
    %v249 = vadd.f32 %v132, %v233
    %v250 = vadd.f32 %v133, %v234
    %v251 = vadd.f32 %v134, %v235
    %v252 = vadd.f32 %v135, %v236
    %v253 = vadd.f32 %v136, %v237
    %v254 = vadd.f32 %v137, %v238
    %v255 = vadd.f32 %v138, %v239
    %v256 = vadd.f32 %v139, %v240
    %v257 = vadd.f32 %v140, %v241
    %v258 = vadd.f32 %v141, %v242
    %v259 = vadd.f32 %v142, %v243
    %v260 = vadd.f32 %v143, %v244
    %v261 = vadd.f32 %v144, %v245
    %v262 = vld [vmem:[%s1 + $0x2] sm:$0x1]
    %263 = vset.pattern.permute.xlu0 2
    %264 = vperm.xlu0 %263, %v12
    %v265 = vpop.permute.xlu0 %264
    %267 = vset.pattern.permute.xlu0 2
    %268 = vperm.xlu0 %267, %v13
    %v269 = vpop.permute.xlu0 %268
    %271 = vset.pattern.permute.xlu0 2
    %272 = vperm.xlu0 %271, %v14
    %v273 = vpop.permute.xlu0 %272
    %275 = vset.pattern.permute.xlu0 2
    %276 = vperm.xlu0 %275, %v15
    %v277 = vpop.permute.xlu0 %276
    %279 = vset.pattern.permute.xlu0 2
    %280 = vperm.xlu0 %279, %v16
    %v281 = vpop.permute.xlu0 %280
    %283 = vset.pattern.permute.xlu0 2
    %284 = vperm.xlu0 %283, %v17
    %v285 = vpop.permute.xlu0 %284
    %287 = vset.pattern.permute.xlu0 2
    %288 = vperm.xlu0 %287, %v18
    %v289 = vpop.permute.xlu0 %288
    %291 = vset.pattern.permute.xlu0 2
    %292 = vperm.xlu0 %291, %v19
    %v293 = vpop.permute.xlu0 %292
    %295 = vset.pattern.permute.xlu0 2
    %296 = vperm.xlu0 %295, %v20
    %v297 = vpop.permute.xlu0 %296
    %299 = vset.pattern.permute.xlu0 2
    %300 = vperm.xlu0 %299, %v21
    %v301 = vpop.permute.xlu0 %300
    %303 = vset.pattern.permute.xlu0 2
    %304 = vperm.xlu0 %303, %v22
    %v305 = vpop.permute.xlu0 %304
    %307 = vset.pattern.permute.xlu0 2
    %308 = vperm.xlu0 %307, %v23
    %v309 = vpop.permute.xlu0 %308
    %311 = vset.pattern.permute.xlu0 2
    %312 = vperm.xlu0 %311, %v24
    %v313 = vpop.permute.xlu0 %312
    %315 = vset.pattern.permute.xlu0 2
    %316 = vperm.xlu0 %315, %v25
    %v317 = vpop.permute.xlu0 %316
    %319 = vset.pattern.permute.xlu0 2
    %320 = vperm.xlu0 %319, %v26
    %v321 = vpop.permute.xlu0 %320
    %323 = vset.pattern.permute.xlu0 2
    %324 = vperm.xlu0 %323, %v27
    %v325 = vpop.permute.xlu0 %324
    %v327 = vlaneseq
    %v328 = vshrl.u32 %v327, 7
    %v329 = vsub.s32 0, %v328
    %v330 = vrot.slane %v262, %v329
    %v331 = vsub.f32 %v265, %v330
    %v332 = vsub.f32 %v269, %v330
    %v333 = vsub.f32 %v273, %v330
    %v334 = vsub.f32 %v277, %v330
    %v335 = vsub.f32 %v281, %v330
    %v336 = vsub.f32 %v285, %v330
    %v337 = vsub.f32 %v289, %v330
    %v338 = vsub.f32 %v293, %v330
    %v339 = vsub.f32 %v297, %v330
    %v340 = vsub.f32 %v301, %v330
    %v341 = vsub.f32 %v305, %v330
    %v342 = vsub.f32 %v309, %v330
    %v343 = vsub.f32 %v313, %v330
    %v344 = vsub.f32 %v317, %v330
    %v345 = vsub.f32 %v321, %v330
    %v346 = vsub.f32 %v325, %v330
    %v347 = vmul.f32 %v331, %v331
    %v348 = vmul.f32 %v332, %v332
    %v349 = vmul.f32 %v333, %v333
    %v350 = vmul.f32 %v334, %v334
    %v351 = vmul.f32 %v335, %v335
    %v352 = vmul.f32 %v336, %v336
    %v353 = vmul.f32 %v337, %v337
    %v354 = vmul.f32 %v338, %v338
    %v355 = vmul.f32 %v339, %v339
    %v356 = vmul.f32 %v340, %v340
    %v357 = vmul.f32 %v341, %v341
    %v358 = vmul.f32 %v342, %v342
    %v359 = vmul.f32 %v343, %v343
    %v360 = vmul.f32 %v344, %v344
    %v361 = vmul.f32 %v345, %v345
    %v362 = vmul.f32 %v346, %v346
    %v363 = vadd.f32 %v246, %v347
    %v364 = vadd.f32 %v247, %v348
    %v365 = vadd.f32 %v248, %v349
    %v366 = vadd.f32 %v249, %v350
    %v367 = vadd.f32 %v250, %v351
    %v368 = vadd.f32 %v251, %v352
    %v369 = vadd.f32 %v252, %v353
    %v370 = vadd.f32 %v253, %v354
    %v371 = vadd.f32 %v254, %v355
    %v372 = vadd.f32 %v255, %v356
    %v373 = vadd.f32 %v256, %v357
    %v374 = vadd.f32 %v257, %v358
    %v375 = vadd.f32 %v258, %v359
    %v376 = vadd.f32 %v259, %v360
    %v377 = vadd.f32 %v260, %v361
    %v378 = vadd.f32 %v261, %v362
    %v379 = vld [vmem:[%s1 + $0x3] sm:$0x1]
    %v380 = vlaneseq
    %v381 = vshrl.u32 %v380, 7
    %v382 = vsub.s32 0, %v381
    %v383 = vrot.slane %v379, %v382
    %v384 = vsub.f32 %v32, %v383
    %v385 = vsub.f32 %v37, %v383
    %v386 = vsub.f32 %v42, %v383
    %v387 = vsub.f32 %v47, %v383
    %v388 = vsub.f32 %v52, %v383
    %v389 = vsub.f32 %v57, %v383
    %v390 = vsub.f32 %v62, %v383
    %v391 = vsub.f32 %v67, %v383
    %v392 = vsub.f32 %v72, %v383
    %v393 = vsub.f32 %v77, %v383
    %v394 = vsub.f32 %v82, %v383
    %v395 = vsub.f32 %v87, %v383
    %v396 = vsub.f32 %v92, %v383
    %v397 = vsub.f32 %v97, %v383
    %v398 = vsub.f32 %v102, %v383
    %v399 = vsub.f32 %v107, %v383
    %v400 = vmul.f32 %v384, %v384
    %v401 = vmul.f32 %v385, %v385
    %v402 = vmul.f32 %v386, %v386
    %v403 = vmul.f32 %v387, %v387
    %v404 = vmul.f32 %v388, %v388
    %v405 = vmul.f32 %v389, %v389
    %v406 = vmul.f32 %v390, %v390
    %v407 = vmul.f32 %v391, %v391
    %v408 = vmul.f32 %v392, %v392
    %v409 = vmul.f32 %v393, %v393
    %v410 = vmul.f32 %v394, %v394
    %v411 = vmul.f32 %v395, %v395
    %v412 = vmul.f32 %v396, %v396
    %v413 = vmul.f32 %v397, %v397
    %v414 = vmul.f32 %v398, %v398
    %v415 = vmul.f32 %v399, %v399
    %v416 = vld [vmem:[%s1 + $0x4] sm:$0x1]
    %v417 = vlaneseq
    %v418 = vshrl.u32 %v417, 7
    %v419 = vsub.s32 0, %v418
    %v420 = vrot.slane %v416, %v419
    %v421 = vsub.f32 %v148, %v420
    %v422 = vsub.f32 %v152, %v420
    %v423 = vsub.f32 %v156, %v420
    %v424 = vsub.f32 %v160, %v420
    %v425 = vsub.f32 %v164, %v420
    %v426 = vsub.f32 %v168, %v420
    %v427 = vsub.f32 %v172, %v420
    %v428 = vsub.f32 %v176, %v420
    %v429 = vsub.f32 %v180, %v420
    %v430 = vsub.f32 %v184, %v420
    %v431 = vsub.f32 %v188, %v420
    %v432 = vsub.f32 %v192, %v420
    %v433 = vsub.f32 %v196, %v420
    %v434 = vsub.f32 %v200, %v420
    %v435 = vsub.f32 %v204, %v420
    %v436 = vsub.f32 %v208, %v420
    %v437 = vmul.f32 %v421, %v421
    %v438 = vmul.f32 %v422, %v422
    %v439 = vmul.f32 %v423, %v423
    %v440 = vmul.f32 %v424, %v424
    %v441 = vmul.f32 %v425, %v425
    %v442 = vmul.f32 %v426, %v426
    %v443 = vmul.f32 %v427, %v427
    %v444 = vmul.f32 %v428, %v428
    %v445 = vmul.f32 %v429, %v429
    %v446 = vmul.f32 %v430, %v430
    %v447 = vmul.f32 %v431, %v431
    %v448 = vmul.f32 %v432, %v432
    %v449 = vmul.f32 %v433, %v433
    %v450 = vmul.f32 %v434, %v434
    %v451 = vmul.f32 %v435, %v435
    %v452 = vmul.f32 %v436, %v436
    %v453 = vadd.f32 %v400, %v437
    %v454 = vadd.f32 %v401, %v438
    %v455 = vadd.f32 %v402, %v439
    %v456 = vadd.f32 %v403, %v440
    %v457 = vadd.f32 %v404, %v441
    %v458 = vadd.f32 %v405, %v442
    %v459 = vadd.f32 %v406, %v443
    %v460 = vadd.f32 %v407, %v444
    %v461 = vadd.f32 %v408, %v445
    %v462 = vadd.f32 %v409, %v446
    %v463 = vadd.f32 %v410, %v447
    %v464 = vadd.f32 %v411, %v448
    %v465 = vadd.f32 %v412, %v449
    %v466 = vadd.f32 %v413, %v450
    %v467 = vadd.f32 %v414, %v451
    %v468 = vadd.f32 %v415, %v452
    %v469 = vld [vmem:[%s1 + $0x5] sm:$0x1]
    %v470 = vlaneseq
    %v471 = vshrl.u32 %v470, 7
    %v472 = vsub.s32 0, %v471
    %v473 = vrot.slane %v469, %v472
    %v474 = vsub.f32 %v265, %v473
    %v475 = vsub.f32 %v269, %v473
    %v476 = vsub.f32 %v273, %v473
    %v477 = vsub.f32 %v277, %v473
    %v478 = vsub.f32 %v281, %v473
    %v479 = vsub.f32 %v285, %v473
    %v480 = vsub.f32 %v289, %v473
    %v481 = vsub.f32 %v293, %v473
    %v482 = vsub.f32 %v297, %v473
    %v483 = vsub.f32 %v301, %v473
    %v484 = vsub.f32 %v305, %v473
    %v485 = vsub.f32 %v309, %v473
    %v486 = vsub.f32 %v313, %v473
    %v487 = vsub.f32 %v317, %v473
    %v488 = vsub.f32 %v321, %v473
    %v489 = vsub.f32 %v325, %v473
    %v490 = vmul.f32 %v474, %v474
    %v491 = vmul.f32 %v475, %v475
    %v492 = vmul.f32 %v476, %v476
    %v493 = vmul.f32 %v477, %v477
    %v494 = vmul.f32 %v478, %v478
    %v495 = vmul.f32 %v479, %v479
    %v496 = vmul.f32 %v480, %v480
    %v497 = vmul.f32 %v481, %v481
    %v498 = vmul.f32 %v482, %v482
    %v499 = vmul.f32 %v483, %v483
    %v500 = vmul.f32 %v484, %v484
    %v501 = vmul.f32 %v485, %v485
    %v502 = vmul.f32 %v486, %v486
    %v503 = vmul.f32 %v487, %v487
    %v504 = vmul.f32 %v488, %v488
    %v505 = vmul.f32 %v489, %v489
    %v506 = vadd.f32 %v453, %v490
    %v507 = vadd.f32 %v454, %v491
    %v508 = vadd.f32 %v455, %v492
    %v509 = vadd.f32 %v456, %v493
    %v510 = vadd.f32 %v457, %v494
    %v511 = vadd.f32 %v458, %v495
    %v512 = vadd.f32 %v459, %v496
    %v513 = vadd.f32 %v460, %v497
    %v514 = vadd.f32 %v461, %v498
    %v515 = vadd.f32 %v462, %v499
    %v516 = vadd.f32 %v463, %v500
    %v517 = vadd.f32 %v464, %v501
    %v518 = vadd.f32 %v465, %v502
    %v519 = vadd.f32 %v466, %v503
    %v520 = vadd.f32 %v467, %v504
    %v521 = vadd.f32 %v468, %v505
    %v522 = vmin.f32 %v363, %v506
    %v523 = vmin.f32 %v364, %v507
    %v524 = vmin.f32 %v365, %v508
    %v525 = vmin.f32 %v366, %v509
    %v526 = vmin.f32 %v367, %v510
    %v527 = vmin.f32 %v368, %v511
    %v528 = vmin.f32 %v369, %v512
    %v529 = vmin.f32 %v370, %v513
    %v530 = vmin.f32 %v371, %v514
    %v531 = vmin.f32 %v372, %v515
    %v532 = vmin.f32 %v373, %v516
    %v533 = vmin.f32 %v374, %v517
    %v534 = vmin.f32 %v375, %v518
    %v535 = vmin.f32 %v376, %v519
    %v536 = vmin.f32 %v377, %v520
    %v537 = vmin.f32 %v378, %v521
    %v538 = vld [vmem:[%s1 + $0x6] sm:$0x1]
    %v539 = vlaneseq
    %v540 = vshrl.u32 %v539, 7
    %v541 = vsub.s32 0, %v540
    %v542 = vrot.slane %v538, %v541
    %v543 = vsub.f32 %v32, %v542
    %v544 = vsub.f32 %v37, %v542
    %v545 = vsub.f32 %v42, %v542
    %v546 = vsub.f32 %v47, %v542
    %v547 = vsub.f32 %v52, %v542
    %v548 = vsub.f32 %v57, %v542
    %v549 = vsub.f32 %v62, %v542
    %v550 = vsub.f32 %v67, %v542
    %v551 = vsub.f32 %v72, %v542
    %v552 = vsub.f32 %v77, %v542
    %v553 = vsub.f32 %v82, %v542
    %v554 = vsub.f32 %v87, %v542
    %v555 = vsub.f32 %v92, %v542
    %v556 = vsub.f32 %v97, %v542
    %v557 = vsub.f32 %v102, %v542
    %v558 = vsub.f32 %v107, %v542
    %v559 = vmul.f32 %v543, %v543
    %v560 = vmul.f32 %v544, %v544
    %v561 = vmul.f32 %v545, %v545
    %v562 = vmul.f32 %v546, %v546
    %v563 = vmul.f32 %v547, %v547
    %v564 = vmul.f32 %v548, %v548
    %v565 = vmul.f32 %v549, %v549
    %v566 = vmul.f32 %v550, %v550
    %v567 = vmul.f32 %v551, %v551
    %v568 = vmul.f32 %v552, %v552
    %v569 = vmul.f32 %v553, %v553
    %v570 = vmul.f32 %v554, %v554
    %v571 = vmul.f32 %v555, %v555
    %v572 = vmul.f32 %v556, %v556
    %v573 = vmul.f32 %v557, %v557
    %v574 = vmul.f32 %v558, %v558
    %v575 = vld [vmem:[%s1 + $0x7] sm:$0x1]
    %v576 = vlaneseq
    %v577 = vshrl.u32 %v576, 7
    %v578 = vsub.s32 0, %v577
    %v579 = vrot.slane %v575, %v578
    %v580 = vsub.f32 %v148, %v579
    %v581 = vsub.f32 %v152, %v579
    %v582 = vsub.f32 %v156, %v579
    %v583 = vsub.f32 %v160, %v579
    %v584 = vsub.f32 %v164, %v579
    %v585 = vsub.f32 %v168, %v579
    %v586 = vsub.f32 %v172, %v579
    %v587 = vsub.f32 %v176, %v579
    %v588 = vsub.f32 %v180, %v579
    %v589 = vsub.f32 %v184, %v579
    %v590 = vsub.f32 %v188, %v579
    %v591 = vsub.f32 %v192, %v579
    %v592 = vsub.f32 %v196, %v579
    %v593 = vsub.f32 %v200, %v579
    %v594 = vsub.f32 %v204, %v579
    %v595 = vsub.f32 %v208, %v579
    %v596 = vmul.f32 %v580, %v580
    %v597 = vmul.f32 %v581, %v581
    %v598 = vmul.f32 %v582, %v582
    %v599 = vmul.f32 %v583, %v583
    %v600 = vmul.f32 %v584, %v584
    %v601 = vmul.f32 %v585, %v585
    %v602 = vmul.f32 %v586, %v586
    %v603 = vmul.f32 %v587, %v587
    %v604 = vmul.f32 %v588, %v588
    %v605 = vmul.f32 %v589, %v589
    %v606 = vmul.f32 %v590, %v590
    %v607 = vmul.f32 %v591, %v591
    %v608 = vmul.f32 %v592, %v592
    %v609 = vmul.f32 %v593, %v593
    %v610 = vmul.f32 %v594, %v594
    %v611 = vmul.f32 %v595, %v595
    %v612 = vadd.f32 %v559, %v596
    %v613 = vadd.f32 %v560, %v597
    %v614 = vadd.f32 %v561, %v598
    %v615 = vadd.f32 %v562, %v599
    %v616 = vadd.f32 %v563, %v600
    %v617 = vadd.f32 %v564, %v601
    %v618 = vadd.f32 %v565, %v602
    %v619 = vadd.f32 %v566, %v603
    %v620 = vadd.f32 %v567, %v604
    %v621 = vadd.f32 %v568, %v605
    %v622 = vadd.f32 %v569, %v606
    %v623 = vadd.f32 %v570, %v607
    %v624 = vadd.f32 %v571, %v608
    %v625 = vadd.f32 %v572, %v609
    %v626 = vadd.f32 %v573, %v610
    %v627 = vadd.f32 %v574, %v611
    %v628 = vld [vmem:[%s1 + $0x8] sm:$0x1]
    %v629 = vlaneseq
    %v630 = vshrl.u32 %v629, 7
    %v631 = vsub.s32 0, %v630
    %v632 = vrot.slane %v628, %v631
    %v633 = vsub.f32 %v265, %v632
    %v634 = vsub.f32 %v269, %v632
    %v635 = vsub.f32 %v273, %v632
    %v636 = vsub.f32 %v277, %v632
    %v637 = vsub.f32 %v281, %v632
    %v638 = vsub.f32 %v285, %v632
    %v639 = vsub.f32 %v289, %v632
    %v640 = vsub.f32 %v293, %v632
    %v641 = vsub.f32 %v297, %v632
    %v642 = vsub.f32 %v301, %v632
    %v643 = vsub.f32 %v305, %v632
    %v644 = vsub.f32 %v309, %v632
    %v645 = vsub.f32 %v313, %v632
    %v646 = vsub.f32 %v317, %v632
    %v647 = vsub.f32 %v321, %v632
    %v648 = vsub.f32 %v325, %v632
    %v649 = vmul.f32 %v633, %v633
    %v650 = vmul.f32 %v634, %v634
    %v651 = vmul.f32 %v635, %v635
    %v652 = vmul.f32 %v636, %v636
    %v653 = vmul.f32 %v637, %v637
    %v654 = vmul.f32 %v638, %v638
    %v655 = vmul.f32 %v639, %v639
    %v656 = vmul.f32 %v640, %v640
    %v657 = vmul.f32 %v641, %v641
    %v658 = vmul.f32 %v642, %v642
    %v659 = vmul.f32 %v643, %v643
    %v660 = vmul.f32 %v644, %v644
    %v661 = vmul.f32 %v645, %v645
    %v662 = vmul.f32 %v646, %v646
    %v663 = vmul.f32 %v647, %v647
    %v664 = vmul.f32 %v648, %v648
    %v665 = vadd.f32 %v612, %v649
    %v666 = vadd.f32 %v613, %v650
    %v667 = vadd.f32 %v614, %v651
    %v668 = vadd.f32 %v615, %v652
    %v669 = vadd.f32 %v616, %v653
    %v670 = vadd.f32 %v617, %v654
    %v671 = vadd.f32 %v618, %v655
    %v672 = vadd.f32 %v619, %v656
    %v673 = vadd.f32 %v620, %v657
    %v674 = vadd.f32 %v621, %v658
    %v675 = vadd.f32 %v622, %v659
    %v676 = vadd.f32 %v623, %v660
    %v677 = vadd.f32 %v624, %v661
    %v678 = vadd.f32 %v625, %v662
    %v679 = vadd.f32 %v626, %v663
    %v680 = vadd.f32 %v627, %v664
    %v681 = vmin.f32 %v522, %v665
    %v682 = vmin.f32 %v523, %v666
    %v683 = vmin.f32 %v524, %v667
    %v684 = vmin.f32 %v525, %v668
    %v685 = vmin.f32 %v526, %v669
    %v686 = vmin.f32 %v527, %v670
    %v687 = vmin.f32 %v528, %v671
    %v688 = vmin.f32 %v529, %v672
    %v689 = vmin.f32 %v530, %v673
    %v690 = vmin.f32 %v531, %v674
    %v691 = vmin.f32 %v532, %v675
    %v692 = vmin.f32 %v533, %v676
    %v693 = vmin.f32 %v534, %v677
    %v694 = vmin.f32 %v535, %v678
    %v695 = vmin.f32 %v536, %v679
    %v696 = vmin.f32 %v537, %v680
    %697 = vxpose.xlu0.b32.start [1/16] %v681, 128
    %698 = vxpose.xlu0.b32.cont [2/16] %v682, 128
    %699 = vxpose.xlu0.b32.cont [3/16] %v683, 128
    %700 = vxpose.xlu0.b32.cont [4/16] %v684, 128
    %701 = vxpose.xlu0.b32.cont [5/16] %v685, 128
    %702 = vxpose.xlu0.b32.cont [6/16] %v686, 128
    %703 = vxpose.xlu0.b32.cont [7/16] %v687, 128
    %704 = vxpose.xlu0.b32.cont [8/16] %v688, 128
    %705 = vxpose.xlu0.b32.cont [9/16] %v689, 128
    %706 = vxpose.xlu0.b32.cont [10/16] %v690, 128
    %707 = vxpose.xlu0.b32.cont [11/16] %v691, 128
    %708 = vxpose.xlu0.b32.cont [12/16] %v692, 128
    %709 = vxpose.xlu0.b32.cont [13/16] %v693, 128
    %710 = vxpose.xlu0.b32.cont [14/16] %v694, 128
    %711 = vxpose.xlu0.b32.cont [15/16] %v695, 128
    %712 = vxpose.xlu0.b32.end [16/16] %v696, 128
    %v713 = vpop.trf.xlu0
    %v714 = vpop.trf.xlu0
    %v715 = vpop.trf.xlu0
    %v716 = vpop.trf.xlu0
    %v717 = vpop.trf.xlu0
    %v718 = vpop.trf.xlu0
    %v719 = vpop.trf.xlu0
    %v720 = vpop.trf.xlu0
    %v721 = vpop.trf.xlu0
    %v722 = vpop.trf.xlu0
    %v723 = vpop.trf.xlu0
    %v724 = vpop.trf.xlu0
    %v725 = vpop.trf.xlu0
    %v726 = vpop.trf.xlu0
    %v727 = vpop.trf.xlu0
    %v728 = vpop.trf.xlu0
    %v729 = vmin.f32 %v713, %v717
    %v730 = vmin.f32 %v714, %v718
    %v731 = vmin.f32 %v715, %v719
    %v732 = vmin.f32 %v716, %v720
    %v733 = vmin.f32 %v729, %v721
    %v734 = vmin.f32 %v730, %v722
    %v735 = vmin.f32 %v731, %v723
    %v736 = vmin.f32 %v732, %v724
    %v737 = vmin.f32 %v733, %v725
    %v738 = vmin.f32 %v734, %v726
    %v739 = vmin.f32 %v735, %v727
    %v740 = vmin.f32 %v736, %v728
    %v741 = vmin.f32 %v737, %v738
    %v742 = vmin.f32 %v739, %v740
    %v743 = vmin.f32 %v741, %v742
    %v744 = vrot.slane %v743, 4
    %v745 = vmin.f32 %v743, %v744
    %v746 = vrot.slane %v745, 2
    %v747 = vmin.f32 %v745, %v746
    %v748 = vrot.slane %v747, 1
    %v749 = vmin.f32 %v747, %v748
    %v750 = vlaneseq
    %vm751 = vcmp.ge.s32.totalorder %v750, 0
    %vm752 = vcmp.lt.s32.totalorder %v750, 128
    %vm753 = vmand %vm751, %vm752
    %754 = vst.msk [vmem:[#allocation2] sm:$0x1] %vm753, %v749
    %v755 = vld [vmem:[%s0 + $0x80] sm:$0xff]
    %v756 = vld [vmem:[%s0 + $0x88] sm:$0xff]
    %v757 = vld [vmem:[%s0 + $0x90] sm:$0xff]
    %v758 = vld [vmem:[%s0 + $0x98] sm:$0xff]
    %v759 = vld [vmem:[%s0 + $0xa0] sm:$0xff]
    %v760 = vld [vmem:[%s0 + $0xa8] sm:$0xff]
    %v761 = vld [vmem:[%s0 + $0xb0] sm:$0xff]
    %v762 = vld [vmem:[%s0 + $0xb8] sm:$0xff]
    %v763 = vld [vmem:[%s0 + $0xc0] sm:$0xff]
    %v764 = vld [vmem:[%s0 + $0xc8] sm:$0xff]
    %v765 = vld [vmem:[%s0 + $0xd0] sm:$0xff]
    %v766 = vld [vmem:[%s0 + $0xd8] sm:$0xff]
    %v767 = vld [vmem:[%s0 + $0xe0] sm:$0xff]
    %v768 = vld [vmem:[%s0 + $0xe8] sm:$0xff]
    %v769 = vld [vmem:[%s0 + $0xf0] sm:$0xff]
    %v770 = vld [vmem:[%s0 + $0xf8] sm:$0xff]
    %v771 = vld [vmem:[%s1] sm:$0x1]
    %773 = vset.pattern.permute.xlu0 0
    %774 = vperm.xlu0 %773, %v755
    %v775 = vpop.permute.xlu0 %774
    %778 = vset.pattern.permute.xlu0 0
    %779 = vperm.xlu0 %778, %v756
    %v780 = vpop.permute.xlu0 %779
    %783 = vset.pattern.permute.xlu0 0
    %784 = vperm.xlu0 %783, %v757
    %v785 = vpop.permute.xlu0 %784
    %788 = vset.pattern.permute.xlu0 0
    %789 = vperm.xlu0 %788, %v758
    %v790 = vpop.permute.xlu0 %789
    %793 = vset.pattern.permute.xlu0 0
    %794 = vperm.xlu0 %793, %v759
    %v795 = vpop.permute.xlu0 %794
    %798 = vset.pattern.permute.xlu0 0
    %799 = vperm.xlu0 %798, %v760
    %v800 = vpop.permute.xlu0 %799
    %803 = vset.pattern.permute.xlu0 0
    %804 = vperm.xlu0 %803, %v761
    %v805 = vpop.permute.xlu0 %804
    %808 = vset.pattern.permute.xlu0 0
    %809 = vperm.xlu0 %808, %v762
    %v810 = vpop.permute.xlu0 %809
    %813 = vset.pattern.permute.xlu0 0
    %814 = vperm.xlu0 %813, %v763
    %v815 = vpop.permute.xlu0 %814
    %818 = vset.pattern.permute.xlu0 0
    %819 = vperm.xlu0 %818, %v764
    %v820 = vpop.permute.xlu0 %819
    %823 = vset.pattern.permute.xlu0 0
    %824 = vperm.xlu0 %823, %v765
    %v825 = vpop.permute.xlu0 %824
    %828 = vset.pattern.permute.xlu0 0
    %829 = vperm.xlu0 %828, %v766
    %v830 = vpop.permute.xlu0 %829
    %833 = vset.pattern.permute.xlu0 0
    %834 = vperm.xlu0 %833, %v767
    %v835 = vpop.permute.xlu0 %834
    %838 = vset.pattern.permute.xlu0 0
    %839 = vperm.xlu0 %838, %v768
    %v840 = vpop.permute.xlu0 %839
    %843 = vset.pattern.permute.xlu0 0
    %844 = vperm.xlu0 %843, %v769
    %v845 = vpop.permute.xlu0 %844
    %848 = vset.pattern.permute.xlu0 0
    %849 = vperm.xlu0 %848, %v770
    %v850 = vpop.permute.xlu0 %849
    %v852 = vlaneseq
    %v853 = vshrl.u32 %v852, 7
    %v854 = vsub.s32 0, %v853
    %v855 = vrot.slane %v771, %v854
    %v856 = vsub.f32 %v775, %v855
    %v857 = vsub.f32 %v780, %v855
    %v858 = vsub.f32 %v785, %v855
    %v859 = vsub.f32 %v790, %v855
    %v860 = vsub.f32 %v795, %v855
    %v861 = vsub.f32 %v800, %v855
    %v862 = vsub.f32 %v805, %v855
    %v863 = vsub.f32 %v810, %v855
    %v864 = vsub.f32 %v815, %v855
    %v865 = vsub.f32 %v820, %v855
    %v866 = vsub.f32 %v825, %v855
    %v867 = vsub.f32 %v830, %v855
    %v868 = vsub.f32 %v835, %v855
    %v869 = vsub.f32 %v840, %v855
    %v870 = vsub.f32 %v845, %v855
    %v871 = vsub.f32 %v850, %v855
    %v872 = vmul.f32 %v856, %v856
    %v873 = vmul.f32 %v857, %v857
    %v874 = vmul.f32 %v858, %v858
    %v875 = vmul.f32 %v859, %v859
    %v876 = vmul.f32 %v860, %v860
    %v877 = vmul.f32 %v861, %v861
    %v878 = vmul.f32 %v862, %v862
    %v879 = vmul.f32 %v863, %v863
    %v880 = vmul.f32 %v864, %v864
    %v881 = vmul.f32 %v865, %v865
    %v882 = vmul.f32 %v866, %v866
    %v883 = vmul.f32 %v867, %v867
    %v884 = vmul.f32 %v868, %v868
    %v885 = vmul.f32 %v869, %v869
    %v886 = vmul.f32 %v870, %v870
    %v887 = vmul.f32 %v871, %v871
    %v888 = vld [vmem:[%s1 + $0x1] sm:$0x1]
    %889 = vset.pattern.permute.xlu0 1
    %890 = vperm.xlu0 %889, %v755
    %v891 = vpop.permute.xlu0 %890
    %893 = vset.pattern.permute.xlu0 1
    %894 = vperm.xlu0 %893, %v756
    %v895 = vpop.permute.xlu0 %894
    %897 = vset.pattern.permute.xlu0 1
    %898 = vperm.xlu0 %897, %v757
    %v899 = vpop.permute.xlu0 %898
    %901 = vset.pattern.permute.xlu0 1
    %902 = vperm.xlu0 %901, %v758
    %v903 = vpop.permute.xlu0 %902
    %905 = vset.pattern.permute.xlu0 1
    %906 = vperm.xlu0 %905, %v759
    %v907 = vpop.permute.xlu0 %906
    %909 = vset.pattern.permute.xlu0 1
    %910 = vperm.xlu0 %909, %v760
    %v911 = vpop.permute.xlu0 %910
    %913 = vset.pattern.permute.xlu0 1
    %914 = vperm.xlu0 %913, %v761
    %v915 = vpop.permute.xlu0 %914
    %917 = vset.pattern.permute.xlu0 1
    %918 = vperm.xlu0 %917, %v762
    %v919 = vpop.permute.xlu0 %918
    %921 = vset.pattern.permute.xlu0 1
    %922 = vperm.xlu0 %921, %v763
    %v923 = vpop.permute.xlu0 %922
    %925 = vset.pattern.permute.xlu0 1
    %926 = vperm.xlu0 %925, %v764
    %v927 = vpop.permute.xlu0 %926
    %929 = vset.pattern.permute.xlu0 1
    %930 = vperm.xlu0 %929, %v765
    %v931 = vpop.permute.xlu0 %930
    %933 = vset.pattern.permute.xlu0 1
    %934 = vperm.xlu0 %933, %v766
    %v935 = vpop.permute.xlu0 %934
    %937 = vset.pattern.permute.xlu0 1
    %938 = vperm.xlu0 %937, %v767
    %v939 = vpop.permute.xlu0 %938
    %941 = vset.pattern.permute.xlu0 1
    %942 = vperm.xlu0 %941, %v768
    %v943 = vpop.permute.xlu0 %942
    %945 = vset.pattern.permute.xlu0 1
    %946 = vperm.xlu0 %945, %v769
    %v947 = vpop.permute.xlu0 %946
    %949 = vset.pattern.permute.xlu0 1
    %950 = vperm.xlu0 %949, %v770
    %v951 = vpop.permute.xlu0 %950
    %v953 = vlaneseq
    %v954 = vshrl.u32 %v953, 7
    %v955 = vsub.s32 0, %v954
    %v956 = vrot.slane %v888, %v955
    %v957 = vsub.f32 %v891, %v956
    %v958 = vsub.f32 %v895, %v956
    %v959 = vsub.f32 %v899, %v956
    %v960 = vsub.f32 %v903, %v956
    %v961 = vsub.f32 %v907, %v956
    %v962 = vsub.f32 %v911, %v956
    %v963 = vsub.f32 %v915, %v956
    %v964 = vsub.f32 %v919, %v956
    %v965 = vsub.f32 %v923, %v956
    %v966 = vsub.f32 %v927, %v956
    %v967 = vsub.f32 %v931, %v956
    %v968 = vsub.f32 %v935, %v956
    %v969 = vsub.f32 %v939, %v956
    %v970 = vsub.f32 %v943, %v956
    %v971 = vsub.f32 %v947, %v956
    %v972 = vsub.f32 %v951, %v956
    %v973 = vmul.f32 %v957, %v957
    %v974 = vmul.f32 %v958, %v958
    %v975 = vmul.f32 %v959, %v959
    %v976 = vmul.f32 %v960, %v960
    %v977 = vmul.f32 %v961, %v961
    %v978 = vmul.f32 %v962, %v962
    %v979 = vmul.f32 %v963, %v963
    %v980 = vmul.f32 %v964, %v964
    %v981 = vmul.f32 %v965, %v965
    %v982 = vmul.f32 %v966, %v966
    %v983 = vmul.f32 %v967, %v967
    %v984 = vmul.f32 %v968, %v968
    %v985 = vmul.f32 %v969, %v969
    %v986 = vmul.f32 %v970, %v970
    %v987 = vmul.f32 %v971, %v971
    %v988 = vmul.f32 %v972, %v972
    %v989 = vadd.f32 %v872, %v973
    %v990 = vadd.f32 %v873, %v974
    %v991 = vadd.f32 %v874, %v975
    %v992 = vadd.f32 %v875, %v976
    %v993 = vadd.f32 %v876, %v977
    %v994 = vadd.f32 %v877, %v978
    %v995 = vadd.f32 %v878, %v979
    %v996 = vadd.f32 %v879, %v980
    %v997 = vadd.f32 %v880, %v981
    %v998 = vadd.f32 %v881, %v982
    %v999 = vadd.f32 %v882, %v983
    %v1000 = vadd.f32 %v883, %v984
    %v1001 = vadd.f32 %v884, %v985
    %v1002 = vadd.f32 %v885, %v986
    %v1003 = vadd.f32 %v886, %v987
    %v1004 = vadd.f32 %v887, %v988
    %v1005 = vld [vmem:[%s1 + $0x2] sm:$0x1]
    %1006 = vset.pattern.permute.xlu0 2
    %1007 = vperm.xlu0 %1006, %v755
    %v1008 = vpop.permute.xlu0 %1007
    %1010 = vset.pattern.permute.xlu0 2
    %1011 = vperm.xlu0 %1010, %v756
    %v1012 = vpop.permute.xlu0 %1011
    %1014 = vset.pattern.permute.xlu0 2
    %1015 = vperm.xlu0 %1014, %v757
    %v1016 = vpop.permute.xlu0 %1015
    %1018 = vset.pattern.permute.xlu0 2
    %1019 = vperm.xlu0 %1018, %v758
    %v1020 = vpop.permute.xlu0 %1019
    %1022 = vset.pattern.permute.xlu0 2
    %1023 = vperm.xlu0 %1022, %v759
    %v1024 = vpop.permute.xlu0 %1023
    %1026 = vset.pattern.permute.xlu0 2
    %1027 = vperm.xlu0 %1026, %v760
    %v1028 = vpop.permute.xlu0 %1027
    %1030 = vset.pattern.permute.xlu0 2
    %1031 = vperm.xlu0 %1030, %v761
    %v1032 = vpop.permute.xlu0 %1031
    %1034 = vset.pattern.permute.xlu0 2
    %1035 = vperm.xlu0 %1034, %v762
    %v1036 = vpop.permute.xlu0 %1035
    %1038 = vset.pattern.permute.xlu0 2
    %1039 = vperm.xlu0 %1038, %v763
    %v1040 = vpop.permute.xlu0 %1039
    %1042 = vset.pattern.permute.xlu0 2
    %1043 = vperm.xlu0 %1042, %v764
    %v1044 = vpop.permute.xlu0 %1043
    %1046 = vset.pattern.permute.xlu0 2
    %1047 = vperm.xlu0 %1046, %v765
    %v1048 = vpop.permute.xlu0 %1047
    %1050 = vset.pattern.permute.xlu0 2
    %1051 = vperm.xlu0 %1050, %v766
    %v1052 = vpop.permute.xlu0 %1051
    %1054 = vset.pattern.permute.xlu0 2
    %1055 = vperm.xlu0 %1054, %v767
    %v1056 = vpop.permute.xlu0 %1055
    %1058 = vset.pattern.permute.xlu0 2
    %1059 = vperm.xlu0 %1058, %v768
    %v1060 = vpop.permute.xlu0 %1059
    %1062 = vset.pattern.permute.xlu0 2
    %1063 = vperm.xlu0 %1062, %v769
    %v1064 = vpop.permute.xlu0 %1063
    %1066 = vset.pattern.permute.xlu0 2
    %1067 = vperm.xlu0 %1066, %v770
    %v1068 = vpop.permute.xlu0 %1067
    %v1070 = vlaneseq
    %v1071 = vshrl.u32 %v1070, 7
    %v1072 = vsub.s32 0, %v1071
    %v1073 = vrot.slane %v1005, %v1072
    %v1074 = vsub.f32 %v1008, %v1073
    %v1075 = vsub.f32 %v1012, %v1073
    %v1076 = vsub.f32 %v1016, %v1073
    %v1077 = vsub.f32 %v1020, %v1073
    %v1078 = vsub.f32 %v1024, %v1073
    %v1079 = vsub.f32 %v1028, %v1073
    %v1080 = vsub.f32 %v1032, %v1073
    %v1081 = vsub.f32 %v1036, %v1073
    %v1082 = vsub.f32 %v1040, %v1073
    %v1083 = vsub.f32 %v1044, %v1073
    %v1084 = vsub.f32 %v1048, %v1073
    %v1085 = vsub.f32 %v1052, %v1073
    %v1086 = vsub.f32 %v1056, %v1073
    %v1087 = vsub.f32 %v1060, %v1073
    %v1088 = vsub.f32 %v1064, %v1073
    %v1089 = vsub.f32 %v1068, %v1073
    %v1090 = vmul.f32 %v1074, %v1074
    %v1091 = vmul.f32 %v1075, %v1075
    %v1092 = vmul.f32 %v1076, %v1076
    %v1093 = vmul.f32 %v1077, %v1077
    %v1094 = vmul.f32 %v1078, %v1078
    %v1095 = vmul.f32 %v1079, %v1079
    %v1096 = vmul.f32 %v1080, %v1080
    %v1097 = vmul.f32 %v1081, %v1081
    %v1098 = vmul.f32 %v1082, %v1082
    %v1099 = vmul.f32 %v1083, %v1083
    %v1100 = vmul.f32 %v1084, %v1084
    %v1101 = vmul.f32 %v1085, %v1085
    %v1102 = vmul.f32 %v1086, %v1086
    %v1103 = vmul.f32 %v1087, %v1087
    %v1104 = vmul.f32 %v1088, %v1088
    %v1105 = vmul.f32 %v1089, %v1089
    %v1106 = vadd.f32 %v989, %v1090
    %v1107 = vadd.f32 %v990, %v1091
    %v1108 = vadd.f32 %v991, %v1092
    %v1109 = vadd.f32 %v992, %v1093
    %v1110 = vadd.f32 %v993, %v1094
    %v1111 = vadd.f32 %v994, %v1095
    %v1112 = vadd.f32 %v995, %v1096
    %v1113 = vadd.f32 %v996, %v1097
    %v1114 = vadd.f32 %v997, %v1098
    %v1115 = vadd.f32 %v998, %v1099
    %v1116 = vadd.f32 %v999, %v1100
    %v1117 = vadd.f32 %v1000, %v1101
    %v1118 = vadd.f32 %v1001, %v1102
    %v1119 = vadd.f32 %v1002, %v1103
    %v1120 = vadd.f32 %v1003, %v1104
    %v1121 = vadd.f32 %v1004, %v1105
    %v1122 = vld [vmem:[%s1 + $0x3] sm:$0x1]
    %v1123 = vlaneseq
    %v1124 = vshrl.u32 %v1123, 7
    %v1125 = vsub.s32 0, %v1124
    %v1126 = vrot.slane %v1122, %v1125
    %v1127 = vsub.f32 %v775, %v1126
    %v1128 = vsub.f32 %v780, %v1126
    %v1129 = vsub.f32 %v785, %v1126
    %v1130 = vsub.f32 %v790, %v1126
    %v1131 = vsub.f32 %v795, %v1126
    %v1132 = vsub.f32 %v800, %v1126
    %v1133 = vsub.f32 %v805, %v1126
    %v1134 = vsub.f32 %v810, %v1126
    %v1135 = vsub.f32 %v815, %v1126
    %v1136 = vsub.f32 %v820, %v1126
    %v1137 = vsub.f32 %v825, %v1126
    %v1138 = vsub.f32 %v830, %v1126
    %v1139 = vsub.f32 %v835, %v1126
    %v1140 = vsub.f32 %v840, %v1126
    %v1141 = vsub.f32 %v845, %v1126
    %v1142 = vsub.f32 %v850, %v1126
    %v1143 = vmul.f32 %v1127, %v1127
    %v1144 = vmul.f32 %v1128, %v1128
    %v1145 = vmul.f32 %v1129, %v1129
    %v1146 = vmul.f32 %v1130, %v1130
    %v1147 = vmul.f32 %v1131, %v1131
    %v1148 = vmul.f32 %v1132, %v1132
    %v1149 = vmul.f32 %v1133, %v1133
    %v1150 = vmul.f32 %v1134, %v1134
    %v1151 = vmul.f32 %v1135, %v1135
    %v1152 = vmul.f32 %v1136, %v1136
    %v1153 = vmul.f32 %v1137, %v1137
    %v1154 = vmul.f32 %v1138, %v1138
    %v1155 = vmul.f32 %v1139, %v1139
    %v1156 = vmul.f32 %v1140, %v1140
    %v1157 = vmul.f32 %v1141, %v1141
    %v1158 = vmul.f32 %v1142, %v1142
    %v1159 = vld [vmem:[%s1 + $0x4] sm:$0x1]
    %v1160 = vlaneseq
    %v1161 = vshrl.u32 %v1160, 7
    %v1162 = vsub.s32 0, %v1161
    %v1163 = vrot.slane %v1159, %v1162
    %v1164 = vsub.f32 %v891, %v1163
    %v1165 = vsub.f32 %v895, %v1163
    %v1166 = vsub.f32 %v899, %v1163
    %v1167 = vsub.f32 %v903, %v1163
    %v1168 = vsub.f32 %v907, %v1163
    %v1169 = vsub.f32 %v911, %v1163
    %v1170 = vsub.f32 %v915, %v1163
    %v1171 = vsub.f32 %v919, %v1163
    %v1172 = vsub.f32 %v923, %v1163
    %v1173 = vsub.f32 %v927, %v1163
    %v1174 = vsub.f32 %v931, %v1163
    %v1175 = vsub.f32 %v935, %v1163
    %v1176 = vsub.f32 %v939, %v1163
    %v1177 = vsub.f32 %v943, %v1163
    %v1178 = vsub.f32 %v947, %v1163
    %v1179 = vsub.f32 %v951, %v1163
    %v1180 = vmul.f32 %v1164, %v1164
    %v1181 = vmul.f32 %v1165, %v1165
    %v1182 = vmul.f32 %v1166, %v1166
    %v1183 = vmul.f32 %v1167, %v1167
    %v1184 = vmul.f32 %v1168, %v1168
    %v1185 = vmul.f32 %v1169, %v1169
    %v1186 = vmul.f32 %v1170, %v1170
    %v1187 = vmul.f32 %v1171, %v1171
    %v1188 = vmul.f32 %v1172, %v1172
    %v1189 = vmul.f32 %v1173, %v1173
    %v1190 = vmul.f32 %v1174, %v1174
    %v1191 = vmul.f32 %v1175, %v1175
    %v1192 = vmul.f32 %v1176, %v1176
    %v1193 = vmul.f32 %v1177, %v1177
    %v1194 = vmul.f32 %v1178, %v1178
    %v1195 = vmul.f32 %v1179, %v1179
    %v1196 = vadd.f32 %v1143, %v1180
    %v1197 = vadd.f32 %v1144, %v1181
    %v1198 = vadd.f32 %v1145, %v1182
    %v1199 = vadd.f32 %v1146, %v1183
    %v1200 = vadd.f32 %v1147, %v1184
    %v1201 = vadd.f32 %v1148, %v1185
    %v1202 = vadd.f32 %v1149, %v1186
    %v1203 = vadd.f32 %v1150, %v1187
    %v1204 = vadd.f32 %v1151, %v1188
    %v1205 = vadd.f32 %v1152, %v1189
    %v1206 = vadd.f32 %v1153, %v1190
    %v1207 = vadd.f32 %v1154, %v1191
    %v1208 = vadd.f32 %v1155, %v1192
    %v1209 = vadd.f32 %v1156, %v1193
    %v1210 = vadd.f32 %v1157, %v1194
    %v1211 = vadd.f32 %v1158, %v1195
    %v1212 = vld [vmem:[%s1 + $0x5] sm:$0x1]
    %v1213 = vlaneseq
    %v1214 = vshrl.u32 %v1213, 7
    %v1215 = vsub.s32 0, %v1214
    %v1216 = vrot.slane %v1212, %v1215
    %v1217 = vsub.f32 %v1008, %v1216
    %v1218 = vsub.f32 %v1012, %v1216
    %v1219 = vsub.f32 %v1016, %v1216
    %v1220 = vsub.f32 %v1020, %v1216
    %v1221 = vsub.f32 %v1024, %v1216
    %v1222 = vsub.f32 %v1028, %v1216
    %v1223 = vsub.f32 %v1032, %v1216
    %v1224 = vsub.f32 %v1036, %v1216
    %v1225 = vsub.f32 %v1040, %v1216
    %v1226 = vsub.f32 %v1044, %v1216
    %v1227 = vsub.f32 %v1048, %v1216
    %v1228 = vsub.f32 %v1052, %v1216
    %v1229 = vsub.f32 %v1056, %v1216
    %v1230 = vsub.f32 %v1060, %v1216
    %v1231 = vsub.f32 %v1064, %v1216
    %v1232 = vsub.f32 %v1068, %v1216
    %v1233 = vmul.f32 %v1217, %v1217
    %v1234 = vmul.f32 %v1218, %v1218
    %v1235 = vmul.f32 %v1219, %v1219
    %v1236 = vmul.f32 %v1220, %v1220
    %v1237 = vmul.f32 %v1221, %v1221
    %v1238 = vmul.f32 %v1222, %v1222
    %v1239 = vmul.f32 %v1223, %v1223
    %v1240 = vmul.f32 %v1224, %v1224
    %v1241 = vmul.f32 %v1225, %v1225
    %v1242 = vmul.f32 %v1226, %v1226
    %v1243 = vmul.f32 %v1227, %v1227
    %v1244 = vmul.f32 %v1228, %v1228
    %v1245 = vmul.f32 %v1229, %v1229
    %v1246 = vmul.f32 %v1230, %v1230
    %v1247 = vmul.f32 %v1231, %v1231
    %v1248 = vmul.f32 %v1232, %v1232
    %v1249 = vadd.f32 %v1196, %v1233
    %v1250 = vadd.f32 %v1197, %v1234
    %v1251 = vadd.f32 %v1198, %v1235
    %v1252 = vadd.f32 %v1199, %v1236
    %v1253 = vadd.f32 %v1200, %v1237
    %v1254 = vadd.f32 %v1201, %v1238
    %v1255 = vadd.f32 %v1202, %v1239
    %v1256 = vadd.f32 %v1203, %v1240
    %v1257 = vadd.f32 %v1204, %v1241
    %v1258 = vadd.f32 %v1205, %v1242
    %v1259 = vadd.f32 %v1206, %v1243
    %v1260 = vadd.f32 %v1207, %v1244
    %v1261 = vadd.f32 %v1208, %v1245
    %v1262 = vadd.f32 %v1209, %v1246
    %v1263 = vadd.f32 %v1210, %v1247
    %v1264 = vadd.f32 %v1211, %v1248
    %v1265 = vmin.f32 %v1106, %v1249
    %v1266 = vmin.f32 %v1107, %v1250
    %v1267 = vmin.f32 %v1108, %v1251
    %v1268 = vmin.f32 %v1109, %v1252
    %v1269 = vmin.f32 %v1110, %v1253
    %v1270 = vmin.f32 %v1111, %v1254
    %v1271 = vmin.f32 %v1112, %v1255
    %v1272 = vmin.f32 %v1113, %v1256
    %v1273 = vmin.f32 %v1114, %v1257
    %v1274 = vmin.f32 %v1115, %v1258
    %v1275 = vmin.f32 %v1116, %v1259
    %v1276 = vmin.f32 %v1117, %v1260
    %v1277 = vmin.f32 %v1118, %v1261
    %v1278 = vmin.f32 %v1119, %v1262
    %v1279 = vmin.f32 %v1120, %v1263
    %v1280 = vmin.f32 %v1121, %v1264
    %v1281 = vld [vmem:[%s1 + $0x6] sm:$0x1]
    %v1282 = vlaneseq
    %v1283 = vshrl.u32 %v1282, 7
    %v1284 = vsub.s32 0, %v1283
    %v1285 = vrot.slane %v1281, %v1284
    %v1286 = vsub.f32 %v775, %v1285
    %v1287 = vsub.f32 %v780, %v1285
    %v1288 = vsub.f32 %v785, %v1285
    %v1289 = vsub.f32 %v790, %v1285
    %v1290 = vsub.f32 %v795, %v1285
    %v1291 = vsub.f32 %v800, %v1285
    %v1292 = vsub.f32 %v805, %v1285
    %v1293 = vsub.f32 %v810, %v1285
    %v1294 = vsub.f32 %v815, %v1285
    %v1295 = vsub.f32 %v820, %v1285
    %v1296 = vsub.f32 %v825, %v1285
    %v1297 = vsub.f32 %v830, %v1285
    %v1298 = vsub.f32 %v835, %v1285
    %v1299 = vsub.f32 %v840, %v1285
    %v1300 = vsub.f32 %v845, %v1285
    %v1301 = vsub.f32 %v850, %v1285
    %v1302 = vmul.f32 %v1286, %v1286
    %v1303 = vmul.f32 %v1287, %v1287
    %v1304 = vmul.f32 %v1288, %v1288
    %v1305 = vmul.f32 %v1289, %v1289
    %v1306 = vmul.f32 %v1290, %v1290
    %v1307 = vmul.f32 %v1291, %v1291
    %v1308 = vmul.f32 %v1292, %v1292
    %v1309 = vmul.f32 %v1293, %v1293
    %v1310 = vmul.f32 %v1294, %v1294
    %v1311 = vmul.f32 %v1295, %v1295
    %v1312 = vmul.f32 %v1296, %v1296
    %v1313 = vmul.f32 %v1297, %v1297
    %v1314 = vmul.f32 %v1298, %v1298
    %v1315 = vmul.f32 %v1299, %v1299
    %v1316 = vmul.f32 %v1300, %v1300
    %v1317 = vmul.f32 %v1301, %v1301
    %v1318 = vld [vmem:[%s1 + $0x7] sm:$0x1]
    %v1319 = vlaneseq
    %v1320 = vshrl.u32 %v1319, 7
    %v1321 = vsub.s32 0, %v1320
    %v1322 = vrot.slane %v1318, %v1321
    %v1323 = vsub.f32 %v891, %v1322
    %v1324 = vsub.f32 %v895, %v1322
    %v1325 = vsub.f32 %v899, %v1322
    %v1326 = vsub.f32 %v903, %v1322
    %v1327 = vsub.f32 %v907, %v1322
    %v1328 = vsub.f32 %v911, %v1322
    %v1329 = vsub.f32 %v915, %v1322
    %v1330 = vsub.f32 %v919, %v1322
    %v1331 = vsub.f32 %v923, %v1322
    %v1332 = vsub.f32 %v927, %v1322
    %v1333 = vsub.f32 %v931, %v1322
    %v1334 = vsub.f32 %v935, %v1322
    %v1335 = vsub.f32 %v939, %v1322
    %v1336 = vsub.f32 %v943, %v1322
    %v1337 = vsub.f32 %v947, %v1322
    %v1338 = vsub.f32 %v951, %v1322
    %v1339 = vmul.f32 %v1323, %v1323
    %v1340 = vmul.f32 %v1324, %v1324
    %v1341 = vmul.f32 %v1325, %v1325
    %v1342 = vmul.f32 %v1326, %v1326
    %v1343 = vmul.f32 %v1327, %v1327
    %v1344 = vmul.f32 %v1328, %v1328
    %v1345 = vmul.f32 %v1329, %v1329
    %v1346 = vmul.f32 %v1330, %v1330
    %v1347 = vmul.f32 %v1331, %v1331
    %v1348 = vmul.f32 %v1332, %v1332
    %v1349 = vmul.f32 %v1333, %v1333
    %v1350 = vmul.f32 %v1334, %v1334
    %v1351 = vmul.f32 %v1335, %v1335
    %v1352 = vmul.f32 %v1336, %v1336
    %v1353 = vmul.f32 %v1337, %v1337
    %v1354 = vmul.f32 %v1338, %v1338
    %v1355 = vadd.f32 %v1302, %v1339
    %v1356 = vadd.f32 %v1303, %v1340
    %v1357 = vadd.f32 %v1304, %v1341
    %v1358 = vadd.f32 %v1305, %v1342
    %v1359 = vadd.f32 %v1306, %v1343
    %v1360 = vadd.f32 %v1307, %v1344
    %v1361 = vadd.f32 %v1308, %v1345
    %v1362 = vadd.f32 %v1309, %v1346
    %v1363 = vadd.f32 %v1310, %v1347
    %v1364 = vadd.f32 %v1311, %v1348
    %v1365 = vadd.f32 %v1312, %v1349
    %v1366 = vadd.f32 %v1313, %v1350
    %v1367 = vadd.f32 %v1314, %v1351
    %v1368 = vadd.f32 %v1315, %v1352
    %v1369 = vadd.f32 %v1316, %v1353
    %v1370 = vadd.f32 %v1317, %v1354
    %v1371 = vld [vmem:[%s1 + $0x8] sm:$0x1]
    %v1372 = vlaneseq
    %v1373 = vshrl.u32 %v1372, 7
    %v1374 = vsub.s32 0, %v1373
    %v1375 = vrot.slane %v1371, %v1374
    %v1376 = vsub.f32 %v1008, %v1375
    %v1377 = vsub.f32 %v1012, %v1375
    %v1378 = vsub.f32 %v1016, %v1375
    %v1379 = vsub.f32 %v1020, %v1375
    %v1380 = vsub.f32 %v1024, %v1375
    %v1381 = vsub.f32 %v1028, %v1375
    %v1382 = vsub.f32 %v1032, %v1375
    %v1383 = vsub.f32 %v1036, %v1375
    %v1384 = vsub.f32 %v1040, %v1375
    %v1385 = vsub.f32 %v1044, %v1375
    %v1386 = vsub.f32 %v1048, %v1375
    %v1387 = vsub.f32 %v1052, %v1375
    %v1388 = vsub.f32 %v1056, %v1375
    %v1389 = vsub.f32 %v1060, %v1375
    %v1390 = vsub.f32 %v1064, %v1375
    %v1391 = vsub.f32 %v1068, %v1375
    %v1392 = vmul.f32 %v1376, %v1376
    %v1393 = vmul.f32 %v1377, %v1377
    %v1394 = vmul.f32 %v1378, %v1378
    %v1395 = vmul.f32 %v1379, %v1379
    %v1396 = vmul.f32 %v1380, %v1380
    %v1397 = vmul.f32 %v1381, %v1381
    %v1398 = vmul.f32 %v1382, %v1382
    %v1399 = vmul.f32 %v1383, %v1383
    %v1400 = vmul.f32 %v1384, %v1384
    %v1401 = vmul.f32 %v1385, %v1385
    %v1402 = vmul.f32 %v1386, %v1386
    %v1403 = vmul.f32 %v1387, %v1387
    %v1404 = vmul.f32 %v1388, %v1388
    %v1405 = vmul.f32 %v1389, %v1389
    %v1406 = vmul.f32 %v1390, %v1390
    %v1407 = vmul.f32 %v1391, %v1391
    %v1408 = vadd.f32 %v1355, %v1392
    %v1409 = vadd.f32 %v1356, %v1393
    %v1410 = vadd.f32 %v1357, %v1394
    %v1411 = vadd.f32 %v1358, %v1395
    %v1412 = vadd.f32 %v1359, %v1396
    %v1413 = vadd.f32 %v1360, %v1397
    %v1414 = vadd.f32 %v1361, %v1398
    %v1415 = vadd.f32 %v1362, %v1399
    %v1416 = vadd.f32 %v1363, %v1400
    %v1417 = vadd.f32 %v1364, %v1401
    %v1418 = vadd.f32 %v1365, %v1402
    %v1419 = vadd.f32 %v1366, %v1403
    %v1420 = vadd.f32 %v1367, %v1404
    %v1421 = vadd.f32 %v1368, %v1405
    %v1422 = vadd.f32 %v1369, %v1406
    %v1423 = vadd.f32 %v1370, %v1407
    %v1424 = vmin.f32 %v1265, %v1408
    %v1425 = vmin.f32 %v1266, %v1409
    %v1426 = vmin.f32 %v1267, %v1410
    %v1427 = vmin.f32 %v1268, %v1411
    %v1428 = vmin.f32 %v1269, %v1412
    %v1429 = vmin.f32 %v1270, %v1413
    %v1430 = vmin.f32 %v1271, %v1414
    %v1431 = vmin.f32 %v1272, %v1415
    %v1432 = vmin.f32 %v1273, %v1416
    %v1433 = vmin.f32 %v1274, %v1417
    %v1434 = vmin.f32 %v1275, %v1418
    %v1435 = vmin.f32 %v1276, %v1419
    %v1436 = vmin.f32 %v1277, %v1420
    %v1437 = vmin.f32 %v1278, %v1421
    %v1438 = vmin.f32 %v1279, %v1422
    %v1439 = vmin.f32 %v1280, %v1423
    %1440 = vxpose.xlu0.b32.start [1/16] %v1424, 128
    %1441 = vxpose.xlu0.b32.cont [2/16] %v1425, 128
    %1442 = vxpose.xlu0.b32.cont [3/16] %v1426, 128
    %1443 = vxpose.xlu0.b32.cont [4/16] %v1427, 128
    %1444 = vxpose.xlu0.b32.cont [5/16] %v1428, 128
    %1445 = vxpose.xlu0.b32.cont [6/16] %v1429, 128
    %1446 = vxpose.xlu0.b32.cont [7/16] %v1430, 128
    %1447 = vxpose.xlu0.b32.cont [8/16] %v1431, 128
    %1448 = vxpose.xlu0.b32.cont [9/16] %v1432, 128
    %1449 = vxpose.xlu0.b32.cont [10/16] %v1433, 128
    %1450 = vxpose.xlu0.b32.cont [11/16] %v1434, 128
    %1451 = vxpose.xlu0.b32.cont [12/16] %v1435, 128
    %1452 = vxpose.xlu0.b32.cont [13/16] %v1436, 128
    %1453 = vxpose.xlu0.b32.cont [14/16] %v1437, 128
    %1454 = vxpose.xlu0.b32.cont [15/16] %v1438, 128
    %1455 = vxpose.xlu0.b32.end [16/16] %v1439, 128
    %v1456 = vpop.trf.xlu0
    %v1457 = vpop.trf.xlu0
    %v1458 = vpop.trf.xlu0
    %v1459 = vpop.trf.xlu0
    %v1460 = vpop.trf.xlu0
    %v1461 = vpop.trf.xlu0
    %v1462 = vpop.trf.xlu0
    %v1463 = vpop.trf.xlu0
    %v1464 = vpop.trf.xlu0
    %v1465 = vpop.trf.xlu0
    %v1466 = vpop.trf.xlu0
    %v1467 = vpop.trf.xlu0
    %v1468 = vpop.trf.xlu0
    %v1469 = vpop.trf.xlu0
    %v1470 = vpop.trf.xlu0
    %v1471 = vpop.trf.xlu0
    %v1472 = vmin.f32 %v1456, %v1460
    %v1473 = vmin.f32 %v1457, %v1461
    %v1474 = vmin.f32 %v1458, %v1462
    %v1475 = vmin.f32 %v1459, %v1463
    %v1476 = vmin.f32 %v1472, %v1464
    %v1477 = vmin.f32 %v1473, %v1465
    %v1478 = vmin.f32 %v1474, %v1466
    %v1479 = vmin.f32 %v1475, %v1467
    %v1480 = vmin.f32 %v1476, %v1468
    %v1481 = vmin.f32 %v1477, %v1469
    %v1482 = vmin.f32 %v1478, %v1470
    %v1483 = vmin.f32 %v1479, %v1471
    %v1484 = vmin.f32 %v1480, %v1481
    %v1485 = vmin.f32 %v1482, %v1483
    %v1486 = vmin.f32 %v1484, %v1485
    %v1487 = vrot.slane %v1486, 4
    %v1488 = vmin.f32 %v1486, %v1487
    %v1489 = vrot.slane %v1488, 2
    %v1490 = vmin.f32 %v1488, %v1489
    %v1491 = vrot.slane %v1490, 1
    %v1492 = vmin.f32 %v1490, %v1491
    %1493 = vst.msk [vmem:[#allocation2 + $0x1] sm:$0x1] %vm753, %v1492
    // Predicated region
    $region10: #{tpu_custom_call.1} parent=1 // pred_check
      _
    $region11: #{tpu_custom_call.1} parent=1 // pred_check_branch
      %1495 = sbr.rel (0) target = $region13
    $region12: #{tpu_custom_call.1} parent=1 // pred_region
      %s1497 = ssub.s32 32, 32
      %1498 = vsyncadd [#allocation3], %s1497
      %s1500 = sshll.u32 [#allocation2], 4
      %s1501 = int_to_ptr.vmem [resolvable:$true] %s1500
      %1503 = dma.vmem_to_hbm [thread:$0]  %s1501, 32, %s2, [#allocation3]
    $region13: #{tpu_custom_call.1} parent=1 // pred_fallthru
      _
    // Predicated region
    $region14: #{tpu_custom_call.1} parent=1 // pred_check
      _
    $region15: #{tpu_custom_call.1} parent=1 // pred_check_branch
      %1505 = sbr.rel (0) target = $region17
    $region16: #{tpu_custom_call.1} parent=1 // pred_region
      %1506 = dma.done [#allocation3], 32
    $region17: #{tpu_custom_call.1} parent=1 // pred_fallthru
      _
    %1507 = vsyncpa [#allocation3], 1

</llo_original>
